<compile_context>
chip_gen: v7x
topology: tpu7x:2x2x1
jax: 0.10.0
libtpu: 0.0.40
codegen_flags: <defaults>
</compile_context>

<pallas_src>
import functools

import jax
import jax.numpy as jnp
from jax.experimental import pallas as pl
from jax.experimental.pallas import tpu as pltpu

LEAKY_SLOPE = 0.01  # PyTorch nn.LeakyReLU() default negative_slope


# --------------------------------------------------------------------------
# Hardware / capability queries
# --------------------------------------------------------------------------
def _tpu_caps():
    """Returns (per-core VMEM bytes, grid-is-split-across-2-TensorCores)."""
    kind = ""
    try:
        kind = jax.devices()[0].device_kind.lower()
    except Exception:
        pass
    is_v7 = ("v7" in kind) or ("7x" in kind)
    vmem_cap = (64 << 20) if is_v7 else (128 << 20)
    try:
        vmem_cap = int(pltpu.get_tpu_info().vmem_capacity_bytes)
    except Exception:
        pass
    two_core = is_v7 or vmem_cap <= (96 << 20)
    return vmem_cap, two_core


_BUFFERED_OK = None


def _buffered_supported():
    """Lowering-only probe (no execution-time except) for pipeline_mode=Buffered(1)."""
    global _BUFFERED_OK
    if _BUFFERED_OK is not None:
        return _BUFFERED_OK
    if not hasattr(pl, "Buffered"):
        _BUFFERED_OK = False
        return False

    def _probe_kernel(x_ref, o_ref):
        o_ref[...] = x_ref[...]

    try:
        fn = pl.pallas_call(
            _probe_kernel,
            out_shape=jax.ShapeDtypeStruct((8, 128), jnp.float32),
            grid=(1,),
            in_specs=[pl.BlockSpec((8, 128), lambda i: (0, 0),
                                   pipeline_mode=pl.Buffered(1))],
            out_specs=pl.BlockSpec((8, 128), lambda i: (0, 0)))
        jax.jit(fn).lower(jax.ShapeDtypeStruct((8, 128), jnp.float32))
        _BUFFERED_OK = True
    except Exception:
        _BUFFERED_OK = False
    return _BUFFERED_OK


# --------------------------------------------------------------------------
# Tile-size selection
# --------------------------------------------------------------------------
def _pick_tile_b(B, act_budget, bytes_per_row, two_core):
    """Largest batch tile that divides B, fits the activation budget, and on
    2-TC parts keeps an even number of grid steps."""
    def fits(tb):
        return tb * bytes_per_row <= act_budget

    if not two_core:
        # Single TensorCore (v5e/v6e): the grid is a serial loop, so a single
        # full-batch step is strictly best when it fits VMEM.
        if fits(B):
            return B
        prefer = (2048, 1024, 512, 256, 128, 64, 32, 16, 8)
    else:
        # v7x: even grid so both TensorCores get equal step counts; prefer
        # M >= 256 to feed the 256-wide MXU, multiples of 16 (bf16 sublanes).
        prefer = (1024, 512, 256, 128, 64, 32, 16, 8)

    for cand in prefer:
        if cand < B and B % cand == 0 and fits(cand):
            if two_core and (B // cand) % 2 != 0:
                continue
            return cand
    if two_core and B % 16 == 0 and fits(B // 2):
        return B // 2
    return B  # last resort: single step (compile fails loudly if it can't fit)


def _pick_tile_h(dim, scale_dim, budget, nominal_tb):
    """Largest 128-multiple divisor of the hidden dim whose double-buffered
    weight chunks + activations fit the VMEM budget."""
    cands = sorted((th for th in range(128, scale_dim + 1, 128)
                    if scale_dim % th == 0), reverse=True)
    if not cands:
        return scale_dim  # hidden axis not 128-aligned; keep it untiled
    for th in cands:
        chunk_w = 2 * 2 * dim * th * 2                  # dbl-buffered w_in + w_out (bf16)
        act = nominal_tb * (8 * dim + 4 * th) * 4
        if chunk_w + act + (8 << 20) <= budget:
            return th
    return cands[-1]


# --------------------------------------------------------------------------
# Kernels
# --------------------------------------------------------------------------
def _resblock_resident_kernel(x_ref,
                              w1_ref, b1_ref, w2_ref, b2_ref,
                              w3_ref, b3_ref, w4_ref, b4_ref,
                              o_ref, *, bf16_epilogue):
    """All weights resident in VMEM; one batch tile per grid step."""
    x_f32 = x_ref[...].astype(jnp.float32)
    act_dt = jnp.bfloat16 if bf16_epilogue else jnp.float32

    def lin_lrelu(h, w_ref, b_ref, out_dt):
        # bf16 operands -> MXU-native matmul, f32 accumulate.
        y = jnp.dot(h.astype(jnp.bfloat16), w_ref[...],
                    preferred_element_type=jnp.float32).astype(out_dt)
        y = y + b_ref[...].astype(out_dt)
        return jnp.maximum(y, jnp.asarray(LEAKY_SLOPE, out_dt) * y)

    h = lin_lrelu(x_f32, w1_ref, b1_ref, act_dt)      # dim   -> 3*dim
    h = lin_lrelu(h, w2_ref, b2_ref, act_dt)          # 3*dim -> dim
    h = lin_lrelu(h, w3_ref, b3_ref, act_dt)          # dim   -> 3*dim
    h = lin_lrelu(h, w4_ref, b4_ref, jnp.float32)     # 3*dim -> dim (f32 for residual)
    o_ref[...] = (h + x_f32).astype(o_ref.dtype)


def _resblock_hidden_tiled_kernel(x_ref, w_in_ref, b_in_ref, w_out_ref, b_out_ref,
                                  o_ref, acc_ref, mid_ref):
    """Hidden (3*dim) axis tiled. grid = (batch_tile, phase, hidden_chunk).
    phase 0: layers 1+2, phase 1: layers 3+4; mid_ref carries the phase-0
    result, acc_ref accumulates the second matmul of each phase over chunks."""
    p = pl.program_id(1)
    k = pl.program_id(2)
    last_k = pl.num_programs(2) - 1

    @pl.when(jnp.logical_and(p == 0, k == 0))
    def _():
        mid_ref[...] = x_ref[...].astype(jnp.float32)

    @pl.when(k == 0)
    def _():
        acc_ref[...] = jnp.zeros_like(acc_ref)

    # First linear of the pair, restricted to this hidden chunk.
    h_in = mid_ref[...].astype(jnp.bfloat16)                      # (tile_b, dim)
    y = jnp.dot(h_in, w_in_ref[...], preferred_element_type=jnp.float32)
    y = y + b_in_ref[...]
    h_k = jnp.maximum(y, LEAKY_SLOPE * y)                         # (tile_b, tile_h)

    # Second linear of the pair: accumulate partial products over chunks.
    acc_ref[...] += jnp.dot(h_k.astype(jnp.bfloat16), w_out_ref[...],
                            preferred_element_type=jnp.float32)

    @pl.when(jnp.logical_and(k == last_k, p == 0))
    def _():
        y2 = acc_ref[...] + b_out_ref[...]
        mid_ref[...] = jnp.maximum(y2, LEAKY_SLOPE * y2)

    @pl.when(jnp.logical_and(k == last_k, p == 1))
    def _():
        y2 = acc_ref[...] + b_out_ref[...]
        h2 = jnp.maximum(y2, LEAKY_SLOPE * y2)
        o_ref[...] = (h2 + x_ref[...].astype(jnp.float32)).astype(o_ref.dtype)


# --------------------------------------------------------------------------
# Wrapper
# --------------------------------------------------------------------------
def resblock_forward(x, params, *, tile_b=None, tile_h=None,
                     bf16_epilogue=False, force_hidden_tiling=False):
    """x: (B, dim) float32. params: pre-transposed bf16 weights / f32 biases.

    bf16_epilogue (v6e/v7x option, resident path only): bias+LeakyReLU in bf16
    for the intermediate layers; keep False on v5e or for tighter numerics.
    """
    B, dim = x.shape
    scale_dim = 3 * dim

    ws = [params[f"w{i}"].astype(jnp.bfloat16) for i in (1, 2, 3, 4)]
    bs = [params[f"b{i}"].astype(jnp.float32) for i in (1, 2, 3, 4)]
    weight_bytes = sum(int(a.size) * a.dtype.itemsize for a in ws + bs)

    vmem_cap, two_core = _tpu_caps()
    budget = (vmem_cap * 3) // 4            # ~48 MiB/TC on v7x, ~96 MiB on v5e/v6e

    buffered = _buffered_supported()
    resident_weight_bytes = weight_bytes if buffered else 2 * weight_bytes

    bytes_per_row_res = 16 * dim * 4        # f32 intermediates + dbl-buffered x/out
    min_act = min(B, 256) * bytes_per_row_res
    use_resident = (not force_hidden_tiling) and \
                   (resident_weight_bytes + min_act <= budget)

    flops = 2 * B * 4 * dim * scale_dim
    bytes_accessed = int(weight_bytes + 2 * B * dim * x.dtype.itemsize)

    if use_resident:
        # ---------------- resident-weights path ----------------
        if tile_b is None:
            tile_b = _pick_tile_b(B, budget - resident_weight_bytes,
                                  bytes_per_row_res, two_core)
        assert B % tile_b == 0, (B, tile_b)
        grid_b = B // tile_b

        vmem_limit = min(budget,
                         resident_weight_bytes + tile_b * bytes_per_row_res + (4 << 20))
        vmem_limit = int(max(vmem_limit, 32 << 20))

        if buffered:
            def wspec(shape):
                # Constant index_map + single buffer: weights stay resident.
                return pl.BlockSpec(shape, lambda i: (0, 0),
                                    pipeline_mode=pl.Buffered(1))
        else:
            def wspec(shape):
                return pl.BlockSpec(shape, lambda i: (0, 0))

        in_specs = [pl.BlockSpec((tile_b, dim), lambda i: (i, 0))]   # x tile
        for w, b in zip(ws, bs):
            in_specs.append(wspec(w.shape))
            in_specs.append(wspec(b.shape))

        fn = pl.pallas_call(
            functools.partial(_resblock_resident_kernel,
                              bf16_epilogue=bf16_epilogue),
            out_shape=jax.ShapeDtypeStruct((B, dim), x.dtype),
            grid_spec=pltpu.PrefetchScalarGridSpec(
                num_scalar_prefetch=0,
                grid=(grid_b,),
                in_specs=in_specs,
                out_specs=pl.BlockSpec((tile_b, dim), lambda i: (i, 0)),
            ),
            compiler_params=pltpu.CompilerParams(
                dimension_semantics=("parallel",),
                vmem_limit_bytes=vmem_limit),
            cost_estimate=pl.CostEstimate(flops=flops, transcendentals=0,
                                          bytes_accessed=bytes_accessed),
        )
        args = [x]
        for w, b in zip(ws, bs):
            args += [w, b]
        return fn(*args)

    # ---------------- hidden-dim tiled path ----------------
    if tile_h is None:
        tile_h = _pick_tile_h(dim, scale_dim, budget, min(B, 256))
    assert scale_dim % tile_h == 0, (scale_dim, tile_h)
    grid_h = scale_dim // tile_h

    chunk_w_bytes = 2 * 2 * dim * tile_h * 2 + 2 * tile_h * 4   # dbl-buffered chunks
    bytes_per_row_tiled = (8 * dim + 4 * tile_h) * 4
    if tile_b is None:
        tile_b = _pick_tile_b(B, budget - chunk_w_bytes, bytes_per_row_tiled, two_core)
    assert B % tile_b == 0, (B, tile_b)
    grid_b = B // tile_b

    vmem_limit = min(budget, chunk_w_bytes + tile_b * bytes_per_row_tiled + (8 << 20))
    vmem_limit = int(max(vmem_limit, 32 << 20))

    # Stack the two "expand" and two "contract" layers along a phase axis so a
    # single BlockSpec streams the right layer's chunk per (phase, chunk) step.
    w_in = jnp.stack([ws[0], ws[2]])     # (2, dim, 3*dim)
    b_in = jnp.stack([bs[0], bs[2]])     # (2, 1, 3*dim)
    w_out = jnp.stack([ws[1], ws[3]])    # (2, 3*dim, dim)
    b_out = jnp.stack([bs[1], bs[3]])    # (2, 1, dim)

    fn = pl.pallas_call(
        _resblock_hidden_tiled_kernel,
        out_shape=jax.ShapeDtypeStruct((B, dim), x.dtype),
        grid_spec=pltpu.PrefetchScalarGridSpec(
            num_scalar_prefetch=0,
            grid=(grid_b, 2, grid_h),
            in_specs=[
                pl.BlockSpec((tile_b, dim), lambda i, p, k: (i, 0)),        # x
                pl.BlockSpec((None, dim, tile_h), lambda i, p, k: (p, 0, k)),  # w_in
                pl.BlockSpec((None, 1, tile_h), lambda i, p, k: (p, 0, k)),    # b_in
                pl.BlockSpec((None, tile_h, dim), lambda i, p, k: (p, k, 0)),  # w_out
                pl.BlockSpec((None, 1, dim), lambda i, p, k: (p, 0, 0)),       # b_out
            ],
            out_specs=pl.BlockSpec((tile_b, dim), lambda i, p, k: (i, 0)),
            scratch_shapes=[pltpu.VMEM((tile_b, dim), jnp.float32),   # acc
                            pltpu.VMEM((tile_b, dim), jnp.float32)],  # mid
        ),
        compiler_params=pltpu.CompilerParams(
            dimension_semantics=("parallel", "arbitrary", "arbitrary"),
            vmem_limit_bytes=vmem_limit),
        cost_estimate=pl.CostEstimate(flops=flops, transcendentals=0,
                                      bytes_accessed=bytes_accessed),
    )
    return fn(x, w_in, b_in, w_out, b_out)


# --------------------------------------------------------------------------
# Params / reference
# --------------------------------------------------------------------------
def init_params(key, dim):
    """nn.Linear-style init (uniform +-1/sqrt(fan_in)); weights pre-transposed
    (in, out) and cast to bf16 (MXU operands); biases f32 (1, out)."""
    scale_dim = 3 * dim
    shapes = [(dim, scale_dim), (scale_dim, dim), (dim, scale_dim), (scale_dim, dim)]
    params = {}
    keys = jax.random.split(key, 8)
    for idx, (fan_in, fan_out) in enumerate(shapes, start=1):
        bound = 1.0 / jnp.sqrt(jnp.float32(fan_in))
        w = jax.random.uniform(keys[2 * (idx - 1)], (fan_in, fan_out),
                               minval=-bound, maxval=bound, dtype=jnp.float32)
        b = jax.random.uniform(keys[2 * (idx - 1) + 1], (1, fan_out),
                               minval=-bound, maxval=bound, dtype=jnp.float32)
        params[f"w{idx}"] = w.astype(jnp.bfloat16)
        params[f"b{idx}"] = b
    return params


def resblock_ref(x, params):
    """Pure-JAX reference using the same bf16-operand / f32-accumulate math."""
    x_f32 = x.astype(jnp.float32)
    h = x_f32
    for i in (1, 2, 3, 4):
        y = jnp.dot(h.astype(jnp.bfloat16), params[f"w{i}"],
                    preferred_element_type=jnp.float32) + params[f"b{i}"]
        h = jnp.maximum(y, LEAKY_SLOPE * y)
    return (h + x_f32).astype(x.dtype)


if __name__ == "__main__":
    key = jax.random.PRNGKey(0)
    k_x, k_p = jax.random.split(key)

    # Small, lane-aligned demo shapes: dim multiple of 128.
    batch, dim = 64, 128
    x = jax.random.normal(k_x, (batch, dim), dtype=jnp.float32)
    params = init_params(k_p, dim)

    ref = jax.block_until_ready(resblock_ref(x, params))

    # Path 1: resident-weights kernel (auto-selected at this dim; on a 1-TC
    # chip this runs as a single full-batch step).
    out = jax.block_until_ready(resblock_forward(x, params))
    assert out.shape == (batch, dim)
    assert jnp.allclose(out, ref, atol=1e-3, rtol=1e-3), "resident path mismatch"

    # Path 2: hidden-dim tiled kernel (auto-selected when the weights exceed
    # the per-TensorCore VMEM budget); force it here to validate correctness.
    out_t = jax.block_until_ready(
        resblock_forward(x, params, force_hidden_tiling=True, tile_h=128))
    assert jnp.allclose(out_t, ref, atol=1e-3, rtol=1e-3), "tiled path mismatch"

    print("KERNEL_OK")
</pallas_src>

<mosaic_0001>
module attributes {stable_mosaic.version = 11 : i64} {
  func.func @_resblock_resident_kernel(%arg0: i32, %arg1: memref<64x128xf32, #tpu.memory_space<vmem>>, %arg2: memref<128x384xbf16, #tpu.memory_space<vmem>>, %arg3: memref<1x384xf32, #tpu.memory_space<vmem>>, %arg4: memref<384x128xbf16, #tpu.memory_space<vmem>>, %arg5: memref<1x128xf32, #tpu.memory_space<vmem>>, %arg6: memref<128x384xbf16, #tpu.memory_space<vmem>>, %arg7: memref<1x384xf32, #tpu.memory_space<vmem>>, %arg8: memref<384x128xbf16, #tpu.memory_space<vmem>>, %arg9: memref<1x128xf32, #tpu.memory_space<vmem>>, %arg10: memref<64x128xf32, #tpu.memory_space<vmem>>) attributes {dimension_semantics = [#tpu.dimension_semantics<parallel>], iteration_bounds = array<i64: 1>, scalar_prefetch = 0 : i64, scratch_operands = 0 : i64, tpu.core_type = #tpu.core_type<tc>, window_params = [{transform_indices = @transform_0, window_bounds = array<i64: 64, 128>}, {pipeline_mode = #tpu.pipeline_mode<synchronous>, transform_indices = @transform_1, window_bounds = array<i64: 128, 384>}, {pipeline_mode = #tpu.pipeline_mode<synchronous>, transform_indices = @transform_2, window_bounds = array<i64: 1, 384>}, {pipeline_mode = #tpu.pipeline_mode<synchronous>, transform_indices = @transform_3, window_bounds = array<i64: 384, 128>}, {pipeline_mode = #tpu.pipeline_mode<synchronous>, transform_indices = @transform_4, window_bounds = array<i64: 1, 128>}, {pipeline_mode = #tpu.pipeline_mode<synchronous>, transform_indices = @transform_5, window_bounds = array<i64: 128, 384>}, {pipeline_mode = #tpu.pipeline_mode<synchronous>, transform_indices = @transform_6, window_bounds = array<i64: 1, 384>}, {pipeline_mode = #tpu.pipeline_mode<synchronous>, transform_indices = @transform_7, window_bounds = array<i64: 384, 128>}, {pipeline_mode = #tpu.pipeline_mode<synchronous>, transform_indices = @transform_8, window_bounds = array<i64: 1, 128>}, {transform_indices = @transform_9, window_bounds = array<i64: 64, 128>}]} {
    %c0 = arith.constant 0 : index
    %c0_0 = arith.constant 0 : index
    %0 = vector.load %arg1[%c0, %c0_0] : memref<64x128xf32, #tpu.memory_space<vmem>>, vector<64x128xf32>
    %1 = arith.truncf %0 : vector<64x128xf32> to vector<64x128xbf16>
    %c0_1 = arith.constant 0 : index
    %c0_2 = arith.constant 0 : index
    %2 = vector.load %arg2[%c0_1, %c0_2] : memref<128x384xbf16, #tpu.memory_space<vmem>>, vector<128x384xbf16>
    %cst = arith.constant dense<0.000000e+00> : vector<64x384xf32>
    %3 = tpu.matmul %1, %2, %cst {dimension_numbers = #tpu.dot_dimension_numbers<[1], [0], [0], [1], [0, 0, 1, 1], [], []>} : vector<64x128xbf16>, vector<128x384xbf16>, vector<64x384xf32> -> vector<64x384xf32>
    %c0_3 = arith.constant 0 : index
    %c0_4 = arith.constant 0 : index
    %4 = vector.load %arg3[%c0_3, %c0_4] : memref<1x384xf32, #tpu.memory_space<vmem>>, vector<1x384xf32>
    %5 = vector.broadcast %4 : vector<1x384xf32> to vector<64x384xf32>
    %6 = arith.addf %3, %5 : vector<64x384xf32>
    %cst_5 = arith.constant 0.00999999977 : f32
    %7 = vector.broadcast %cst_5 : f32 to vector<64x384xf32>
    %8 = arith.mulf %7, %6 : vector<64x384xf32>
    %9 = arith.maximumf %6, %8 : vector<64x384xf32>
    %10 = arith.truncf %9 : vector<64x384xf32> to vector<64x384xbf16>
    %c0_6 = arith.constant 0 : index
    %c0_7 = arith.constant 0 : index
    %11 = vector.load %arg4[%c0_6, %c0_7] : memref<384x128xbf16, #tpu.memory_space<vmem>>, vector<384x128xbf16>
    %cst_8 = arith.constant dense<0.000000e+00> : vector<64x128xf32>
    %12 = tpu.matmul %10, %11, %cst_8 {dimension_numbers = #tpu.dot_dimension_numbers<[1], [0], [0], [1], [0, 0, 1, 1], [], []>} : vector<64x384xbf16>, vector<384x128xbf16>, vector<64x128xf32> -> vector<64x128xf32>
    %c0_9 = arith.constant 0 : index
    %c0_10 = arith.constant 0 : index
    %13 = vector.load %arg5[%c0_9, %c0_10] : memref<1x128xf32, #tpu.memory_space<vmem>>, vector<1x128xf32>
    %14 = vector.broadcast %13 : vector<1x128xf32> to vector<64x128xf32>
    %15 = arith.addf %12, %14 : vector<64x128xf32>
    %cst_11 = arith.constant 0.00999999977 : f32
    %16 = vector.broadcast %cst_11 : f32 to vector<64x128xf32>
    %17 = arith.mulf %16, %15 : vector<64x128xf32>
    %18 = arith.maximumf %15, %17 : vector<64x128xf32>
    %19 = arith.truncf %18 : vector<64x128xf32> to vector<64x128xbf16>
    %c0_12 = arith.constant 0 : index
    %c0_13 = arith.constant 0 : index
    %20 = vector.load %arg6[%c0_12, %c0_13] : memref<128x384xbf16, #tpu.memory_space<vmem>>, vector<128x384xbf16>
    %cst_14 = arith.constant dense<0.000000e+00> : vector<64x384xf32>
    %21 = tpu.matmul %19, %20, %cst_14 {dimension_numbers = #tpu.dot_dimension_numbers<[1], [0], [0], [1], [0, 0, 1, 1], [], []>} : vector<64x128xbf16>, vector<128x384xbf16>, vector<64x384xf32> -> vector<64x384xf32>
    %c0_15 = arith.constant 0 : index
    %c0_16 = arith.constant 0 : index
    %22 = vector.load %arg7[%c0_15, %c0_16] : memref<1x384xf32, #tpu.memory_space<vmem>>, vector<1x384xf32>
    %23 = vector.broadcast %22 : vector<1x384xf32> to vector<64x384xf32>
    %24 = arith.addf %21, %23 : vector<64x384xf32>
    %cst_17 = arith.constant 0.00999999977 : f32
    %25 = vector.broadcast %cst_17 : f32 to vector<64x384xf32>
    %26 = arith.mulf %25, %24 : vector<64x384xf32>
    %27 = arith.maximumf %24, %26 : vector<64x384xf32>
    %28 = arith.truncf %27 : vector<64x384xf32> to vector<64x384xbf16>
    %c0_18 = arith.constant 0 : index
    %c0_19 = arith.constant 0 : index
    %29 = vector.load %arg8[%c0_18, %c0_19] : memref<384x128xbf16, #tpu.memory_space<vmem>>, vector<384x128xbf16>
    %cst_20 = arith.constant dense<0.000000e+00> : vector<64x128xf32>
    %30 = tpu.matmul %28, %29, %cst_20 {dimension_numbers = #tpu.dot_dimension_numbers<[1], [0], [0], [1], [0, 0, 1, 1], [], []>} : vector<64x384xbf16>, vector<384x128xbf16>, vector<64x128xf32> -> vector<64x128xf32>
    %c0_21 = arith.constant 0 : index
    %c0_22 = arith.constant 0 : index
    %31 = vector.load %arg9[%c0_21, %c0_22] : memref<1x128xf32, #tpu.memory_space<vmem>>, vector<1x128xf32>
    %32 = vector.broadcast %31 : vector<1x128xf32> to vector<64x128xf32>
    %33 = arith.addf %30, %32 : vector<64x128xf32>
    %cst_23 = arith.constant 0.00999999977 : f32
    %34 = vector.broadcast %cst_23 : f32 to vector<64x128xf32>
    %35 = arith.mulf %34, %33 : vector<64x128xf32>
    %36 = arith.maximumf %33, %35 : vector<64x128xf32>
    %37 = arith.addf %36, %0 : vector<64x128xf32>
    %c0_24 = arith.constant 0 : index
    %c0_25 = arith.constant 0 : index
    %38 = vector.load %arg10[%c0_24, %c0_25] : memref<64x128xf32, #tpu.memory_space<vmem>>, vector<64x128xf32>
    tpu.vector_store %arg10[%c0_24, %c0_25], %37 {strides = array<i32>} : memref<64x128xf32, #tpu.memory_space<vmem>>, vector<64x128xf32>,
    return
  }
  func.func @transform_0(%arg0: i32) -> (i32, i32) {
    %c0_i32 = arith.constant 0 : i32
    %c0_i32_0 = arith.constant 0 : i32
    return %arg0, %c0_i32 : i32, i32
  }
  func.func @transform_1(%arg0: i32) -> (i32, i32) {
    %c0_i32 = arith.constant 0 : i32
    %c0_i32_0 = arith.constant 0 : i32
    %c0_i32_1 = arith.constant 0 : i32
    return %c0_i32, %c0_i32_0 : i32, i32
  }
  func.func @transform_2(%arg0: i32) -> (i32, i32) {
    %c0_i32 = arith.constant 0 : i32
    %c0_i32_0 = arith.constant 0 : i32
    %c0_i32_1 = arith.constant 0 : i32
    return %c0_i32, %c0_i32_0 : i32, i32
  }
  func.func @transform_3(%arg0: i32) -> (i32, i32) {
    %c0_i32 = arith.constant 0 : i32
    %c0_i32_0 = arith.constant 0 : i32
    %c0_i32_1 = arith.constant 0 : i32
    return %c0_i32, %c0_i32_0 : i32, i32
  }
  func.func @transform_4(%arg0: i32) -> (i32, i32) {
    %c0_i32 = arith.constant 0 : i32
    %c0_i32_0 = arith.constant 0 : i32
    %c0_i32_1 = arith.constant 0 : i32
    return %c0_i32, %c0_i32_0 : i32, i32
  }
  func.func @transform_5(%arg0: i32) -> (i32, i32) {
    %c0_i32 = arith.constant 0 : i32
    %c0_i32_0 = arith.constant 0 : i32
    %c0_i32_1 = arith.constant 0 : i32
    return %c0_i32, %c0_i32_0 : i32, i32
  }
  func.func @transform_6(%arg0: i32) -> (i32, i32) {
    %c0_i32 = arith.constant 0 : i32
    %c0_i32_0 = arith.constant 0 : i32
    %c0_i32_1 = arith.constant 0 : i32
    return %c0_i32, %c0_i32_0 : i32, i32
  }
  func.func @transform_7(%arg0: i32) -> (i32, i32) {
    %c0_i32 = arith.constant 0 : i32
    %c0_i32_0 = arith.constant 0 : i32
    %c0_i32_1 = arith.constant 0 : i32
    return %c0_i32, %c0_i32_0 : i32, i32
  }
  func.func @transform_8(%arg0: i32) -> (i32, i32) {
    %c0_i32 = arith.constant 0 : i32
    %c0_i32_0 = arith.constant 0 : i32
    %c0_i32_1 = arith.constant 0 : i32
    return %c0_i32, %c0_i32_0 : i32, i32
  }
  func.func @transform_9(%arg0: i32) -> (i32, i32) {
    %c0_i32 = arith.constant 0 : i32
    %c0_i32_0 = arith.constant 0 : i32
    return %arg0, %c0_i32 : i32, i32
  }
}

</mosaic_0001>

<llo_original>
// kernel: tpu_custom_call.1
$region0: #{tpu_custom_call.1}
  #allocation0 [shape = 'u32[]', space=smem, size = 0x4, offset = 0x4, fixed_abs, tag = 'smem constant byte address 0x4 - core index']
  #allocation1 [shape = 'u32[144,128]{1,0:T(1,128)}', space=vmem, size = 0x12000, scoped, tag = 'internal scratch']
  %s0 = inlined_call_operand.hbm [shape: f32[64,128], index: 0, kind: input, shape index: {}]
  %s1 = inlined_call_operand.hbm [shape: bf16[128,384], index: 1, kind: input, shape index: {}]
  %s2 = inlined_call_operand.vmem [shape: f32[1,384], index: 2, kind: input, shape index: {}]
  %s3 = inlined_call_operand.hbm [shape: bf16[384,128], index: 3, kind: input, shape index: {}]
  %s4 = inlined_call_operand.vmem [shape: f32[1,128], index: 4, kind: input, shape index: {}]
  %s5 = inlined_call_operand.hbm [shape: bf16[128,384], index: 5, kind: input, shape index: {}]
  %s6 = inlined_call_operand.vmem [shape: f32[1,384], index: 6, kind: input, shape index: {}]
  %s7 = inlined_call_operand.hbm [shape: bf16[384,128], index: 7, kind: input, shape index: {}]
  %s8 = inlined_call_operand.vmem [shape: f32[1,128], index: 8, kind: input, shape index: {}]
  %s9 = inlined_call_operand.hbm [shape: f32[64,128], index: 9, kind: output, shape index: {}]
  %s10 = sld [smem:[#allocation0]]
  $region66: #{tpu_custom_call.1} parent=0
    _
  %s12 = ssub.s32 1, %s10
  %s13 = scalar_select 0, %s12, %s10
  $region1: #{tpu_custom_call.1} parent=0
    #allocation2 [shape = 'u8[32768]{0}', space=vmem, size = 0x8000, scoped, tag = 'input window, operand 0, single buffered']
    #allocation3 [shape = 's32[1]{0}', space=sflag, size = 0x4, scoped, tag = 'scoped memory for tpu_custom_call.1']
    #allocation4 [shape = 's32[1]{0}', space=sflag, size = 0x4, scoped, tag = 'scoped memory for tpu_custom_call.1']
    #allocation5 [shape = 'u8[98304]{0}', space=vmem, size = 0x18000, scoped, tag = 'input window, operand 1, single buffered']
    #allocation6 [shape = 's32[1]{0}', space=sflag, size = 0x4, scoped, tag = 'scoped memory for tpu_custom_call.1']
    #allocation7 [shape = 'u8[98304]{0}', space=vmem, size = 0x18000, scoped, tag = 'input window, operand 3, single buffered']
    #allocation8 [shape = 'u8[98304]{0}', space=vmem, size = 0x18000, scoped, tag = 'input window, operand 5, single buffered']
    #allocation9 [shape = 's32[1]{0}', space=sflag, size = 0x4, scoped, tag = 'scoped memory for tpu_custom_call.1']
    #allocation10 [shape = 'u8[98304]{0}', space=vmem, size = 0x18000, scoped, tag = 'input window, operand 7, single buffered']
    #allocation11 [shape = 'u8[32768]{0}', space=vmem, size = 0x8000, scoped, tag = 'output window, operand 0, single buffered']
    %14 = vsyncpa [#allocation3], 0
    %15 = vsyncpa [#allocation6], 0
    %16 = vsyncpa [#allocation9], 0
    %17 = vsyncpa [#allocation4], 0
    // Predicated region
    $region2: #{tpu_custom_call.1} parent=1 // pred_check
      _
    $region3: #{tpu_custom_call.1} parent=1 // pred_check_branch
      %19 = sbr.rel (0) target = $region5
    $region4: #{tpu_custom_call.1} parent=1 // pred_region
      %s21 = ssub.s32 1024, 1024
      %22 = vsyncadd [#allocation3], %s21
      %s23 = sshll.u32 [#allocation2], 4
      %s24 = int_to_ptr.vmem [resolvable:$true] %s23
      %29 = dma.hbm_to_vmem [thread:$0]  %s0, 1024, %s24, [#allocation3], 128, 128, 8
    $region5: #{tpu_custom_call.1} parent=1 // pred_fallthru
      _
    // Predicated region
    $region6: #{tpu_custom_call.1} parent=1 // pred_check
      _
    $region7: #{tpu_custom_call.1} parent=1 // pred_check_branch
      %31 = sbr.rel (0) target = $region9
    $region8: #{tpu_custom_call.1} parent=1 // pred_region
      %s33 = ssub.s32 3072, 3072
      %34 = vsyncadd [#allocation6], %s33
      %s35 = sshll.u32 [#allocation5], 4
      %s36 = int_to_ptr.vmem [resolvable:$true] %s35
      %41 = dma.hbm_to_vmem [thread:$0]  %s1, 3072, %s36, [#allocation6], 192, 192, 12
    $region9: #{tpu_custom_call.1} parent=1 // pred_fallthru
      _
    // Predicated region
    $region10: #{tpu_custom_call.1} parent=1 // pred_check
      _
    $region11: #{tpu_custom_call.1} parent=1 // pred_check_branch
      %43 = sbr.rel (0) target = $region13
    $region12: #{tpu_custom_call.1} parent=1 // pred_region
      _
    $region13: #{tpu_custom_call.1} parent=1 // pred_fallthru
      _
    // Predicated region
    $region14: #{tpu_custom_call.1} parent=1 // pred_check
      _
    $region15: #{tpu_custom_call.1} parent=1 // pred_check_branch
      %45 = sbr.rel (0) target = $region17
    $region16: #{tpu_custom_call.1} parent=1 // pred_region
      %s47 = ssub.s32 3072, 3072
      %48 = vsyncadd [#allocation6], %s47
      %s49 = sshll.u32 [#allocation7], 4
      %s50 = int_to_ptr.vmem [resolvable:$true] %s49
      %55 = dma.hbm_to_vmem [thread:$0]  %s3, 3072, %s50, [#allocation6], 64, 64, 4
    $region17: #{tpu_custom_call.1} parent=1 // pred_fallthru
      _
    // Predicated region
    $region18: #{tpu_custom_call.1} parent=1 // pred_check
      _
    $region19: #{tpu_custom_call.1} parent=1 // pred_check_branch
      %57 = sbr.rel (0) target = $region21
    $region20: #{tpu_custom_call.1} parent=1 // pred_region
      _
    $region21: #{tpu_custom_call.1} parent=1 // pred_fallthru
      _
    // Predicated region
    $region22: #{tpu_custom_call.1} parent=1 // pred_check
      _
    $region23: #{tpu_custom_call.1} parent=1 // pred_check_branch
      %59 = sbr.rel (0) target = $region25
    $region24: #{tpu_custom_call.1} parent=1 // pred_region
      %s61 = ssub.s32 3072, 3072
      %62 = vsyncadd [#allocation9], %s61
      %s63 = sshll.u32 [#allocation8], 4
      %s64 = int_to_ptr.vmem [resolvable:$true] %s63
      %69 = dma.hbm_to_vmem [thread:$0]  %s5, 3072, %s64, [#allocation9], 192, 192, 12
    $region25: #{tpu_custom_call.1} parent=1 // pred_fallthru
      _
    // Predicated region
    $region26: #{tpu_custom_call.1} parent=1 // pred_check
      _
    $region27: #{tpu_custom_call.1} parent=1 // pred_check_branch
      %71 = sbr.rel (0) target = $region29
    $region28: #{tpu_custom_call.1} parent=1 // pred_region
      _
    $region29: #{tpu_custom_call.1} parent=1 // pred_fallthru
      _
    // Predicated region
    $region30: #{tpu_custom_call.1} parent=1 // pred_check
      _
    $region31: #{tpu_custom_call.1} parent=1 // pred_check_branch
      %73 = sbr.rel (0) target = $region33
    $region32: #{tpu_custom_call.1} parent=1 // pred_region
      %s75 = ssub.s32 3072, 3072
      %76 = vsyncadd [#allocation9], %s75
      %s77 = sshll.u32 [#allocation10], 4
      %s78 = int_to_ptr.vmem [resolvable:$true] %s77
      %83 = dma.hbm_to_vmem [thread:$0]  %s7, 3072, %s78, [#allocation9], 64, 64, 4
    $region33: #{tpu_custom_call.1} parent=1 // pred_fallthru
      _
    // Predicated region
    $region34: #{tpu_custom_call.1} parent=1 // pred_check
      _
    $region35: #{tpu_custom_call.1} parent=1 // pred_check_branch
      %85 = sbr.rel (0) target = $region37
    $region36: #{tpu_custom_call.1} parent=1 // pred_region
      _
    $region37: #{tpu_custom_call.1} parent=1 // pred_fallthru
      _
    // Predicated region
    $region38: #{tpu_custom_call.1} parent=1 // pred_check
      _
    $region39: #{tpu_custom_call.1} parent=1 // pred_check_branch
      %87 = sbr.rel (0) target = $region41
    $region40: #{tpu_custom_call.1} parent=1 // pred_region
      %88 = dma.done [#allocation3], 1024
    $region41: #{tpu_custom_call.1} parent=1 // pred_fallthru
      _
    // Predicated region
    $region42: #{tpu_custom_call.1} parent=1 // pred_check
      _
    $region43: #{tpu_custom_call.1} parent=1 // pred_check_branch
      %90 = sbr.rel (0) target = $region45
    $region44: #{tpu_custom_call.1} parent=1 // pred_region
      %91 = dma.done [#allocation6], 3072
    $region45: #{tpu_custom_call.1} parent=1 // pred_fallthru
      _
    // Predicated region
    $region46: #{tpu_custom_call.1} parent=1 // pred_check
      _
    $region47: #{tpu_custom_call.1} parent=1 // pred_check_branch
      %93 = sbr.rel (0) target = $region49
    $region48: #{tpu_custom_call.1} parent=1 // pred_region
      %94 = dma.done [#allocation6], 3072
    $region49: #{tpu_custom_call.1} parent=1 // pred_fallthru
      _
    // Predicated region
    $region50: #{tpu_custom_call.1} parent=1 // pred_check
      _
    $region51: #{tpu_custom_call.1} parent=1 // pred_check_branch
      %96 = sbr.rel (0) target = $region53
    $region52: #{tpu_custom_call.1} parent=1 // pred_region
      %97 = dma.done [#allocation9], 3072
    $region53: #{tpu_custom_call.1} parent=1 // pred_fallthru
      _
    // Predicated region
    $region54: #{tpu_custom_call.1} parent=1 // pred_check
      _
    $region55: #{tpu_custom_call.1} parent=1 // pred_check_branch
      %99 = sbr.rel (0) target = $region57
    $region56: #{tpu_custom_call.1} parent=1 // pred_region
      %100 = dma.done [#allocation9], 3072
    $region57: #{tpu_custom_call.1} parent=1 // pred_fallthru
      _
    %v102 = vld [vmem:[#allocation2] sm:$0xff]
    %v103 = vld [vmem:[#allocation2 + $0x8] sm:$0xff]
    %v104 = vld [vmem:[#allocation2 + $0x10] sm:$0xff]
    %v105 = vld [vmem:[#allocation2 + $0x18] sm:$0xff]
    %v106 = vld [vmem:[#allocation2 + $0x20] sm:$0xff]
    %v107 = vld [vmem:[#allocation2 + $0x28] sm:$0xff]
    %v108 = vld [vmem:[#allocation2 + $0x30] sm:$0xff]
    %v109 = vld [vmem:[#allocation2 + $0x38] sm:$0xff]
    %v110 = vpack.c.bf16 %v103, %v102
    %v111 = vpack.c.bf16 %v105, %v104
    %v112 = vpack.c.bf16 %v107, %v106
    %v113 = vpack.c.bf16 %v109, %v108
    %v114 = vld [vmem:[#allocation5] sm:$0xff]
    %v115 = vld [vmem:[#allocation5 + $0x8] sm:$0xf]
    %v116 = vld [vmem:[#allocation5 + $0xc] sm:$0xff]
    %v117 = vld [vmem:[#allocation5 + $0x14] sm:$0xf]
    %v118 = vld [vmem:[#allocation5 + $0x18] sm:$0xff]
    %v119 = vld [vmem:[#allocation5 + $0x20] sm:$0xf]
    %v120 = vld [vmem:[#allocation5 + $0x24] sm:$0xff]
    %v121 = vld [vmem:[#allocation5 + $0x2c] sm:$0xf]
    %v122 = vld [vmem:[#allocation5 + $0x30] sm:$0xff]
    %v123 = vld [vmem:[#allocation5 + $0x38] sm:$0xf]
    %v124 = vld [vmem:[#allocation5 + $0x3c] sm:$0xff]
    %v125 = vld [vmem:[#allocation5 + $0x44] sm:$0xf]
    %v126 = vld [vmem:[#allocation5 + $0x48] sm:$0xff]
    %v127 = vld [vmem:[#allocation5 + $0x50] sm:$0xf]
    %v128 = vld [vmem:[#allocation5 + $0x54] sm:$0xff]
    %v129 = vld [vmem:[#allocation5 + $0x5c] sm:$0xf]
    %v130 = vld [vmem:[#allocation5 + $0x60] sm:$0xff]
    %v131 = vld [vmem:[#allocation5 + $0x68] sm:$0xf]
    %v132 = vld [vmem:[#allocation5 + $0x6c] sm:$0xff]
    %v133 = vld [vmem:[#allocation5 + $0x74] sm:$0xf]
    %v134 = vld [vmem:[#allocation5 + $0x78] sm:$0xff]
    %v135 = vld [vmem:[#allocation5 + $0x80] sm:$0xf]
    %v136 = vld [vmem:[#allocation5 + $0x84] sm:$0xff]
    %v137 = vld [vmem:[#allocation5 + $0x8c] sm:$0xf]
    %v138 = vld [vmem:[#allocation5 + $0x90] sm:$0xff]
    %v139 = vld [vmem:[#allocation5 + $0x98] sm:$0xf]
    %v140 = vld [vmem:[#allocation5 + $0x9c] sm:$0xff]
    %v141 = vld [vmem:[#allocation5 + $0xa4] sm:$0xf]
    %v142 = vld [vmem:[#allocation5 + $0xa8] sm:$0xff]
    %v143 = vld [vmem:[#allocation5 + $0xb0] sm:$0xf]
    %v144 = vld [vmem:[#allocation5 + $0xb4] sm:$0xff]
    %v145 = vld [vmem:[#allocation5 + $0xbc] sm:$0xf]
    %v146 = vld [vmem:[%s2] sm:$0x7]
    %v148 = vlaneseq
    %v149 = vshrl.u32 %v148, 7
    %v150 = vsub.s32 0, %v149
    %v151 = vrot.slane %v146, %v150
    %v152 = vlaneseq
    %v153 = vshrl.u32 %v152, 7
    %v154 = vsub.s32 1, %v153
    %v155 = vrot.slane %v146, %v154
    %v156 = vlaneseq
    %v157 = vshrl.u32 %v156, 7
    %v158 = vsub.s32 2, %v157
    %v159 = vrot.slane %v146, %v158
    %v195 = vunpack.c.l.b16 %v114
    %v196 = vunpack.c.h.b16 %v114
    %v197 = vunpack.c.l.b16 %v115
    %v198 = vunpack.c.l.b16 %v116
    %v199 = vunpack.c.h.b16 %v116
    %v200 = vunpack.c.l.b16 %v117
    %v201 = vunpack.c.l.b16 %v118
    %v202 = vunpack.c.h.b16 %v118
    %v203 = vunpack.c.l.b16 %v119
    %v204 = vunpack.c.l.b16 %v120
    %v205 = vunpack.c.h.b16 %v120
    %v206 = vunpack.c.l.b16 %v121
    %v207 = vunpack.c.l.b16 %v122
    %v208 = vunpack.c.h.b16 %v122
    %v209 = vunpack.c.l.b16 %v123
    %v210 = vunpack.c.l.b16 %v124
    %v211 = vunpack.c.h.b16 %v124
    %v212 = vunpack.c.l.b16 %v125
    %v213 = vunpack.c.l.b16 %v126
    %v214 = vunpack.c.h.b16 %v126
    %v215 = vunpack.c.l.b16 %v127
    %v216 = vunpack.c.l.b16 %v128
    %v217 = vunpack.c.h.b16 %v128
    %v218 = vunpack.c.l.b16 %v129
    %v219 = vunpack.c.l.b16 %v130
    %v220 = vunpack.c.h.b16 %v130
    %v221 = vunpack.c.l.b16 %v131
    %v222 = vunpack.c.l.b16 %v132
    %v223 = vunpack.c.h.b16 %v132
    %v224 = vunpack.c.l.b16 %v133
    %v225 = vunpack.c.l.b16 %v134
    %v226 = vunpack.c.h.b16 %v134
    %v227 = vunpack.c.l.b16 %v135
    %v228 = vunpack.c.l.b16 %v136
    %v229 = vunpack.c.h.b16 %v136
    %v230 = vunpack.c.l.b16 %v137
    %v231 = vunpack.c.l.b16 %v138
    %v232 = vunpack.c.h.b16 %v138
    %v233 = vunpack.c.l.b16 %v139
    %v234 = vunpack.c.l.b16 %v140
    %v235 = vunpack.c.h.b16 %v140
    %v236 = vunpack.c.l.b16 %v141
    %v237 = vunpack.c.l.b16 %v142
    %v238 = vunpack.c.h.b16 %v142
    %v239 = vunpack.c.l.b16 %v143
    %v240 = vunpack.c.l.b16 %v144
    %v241 = vunpack.c.h.b16 %v144
    %v242 = vunpack.c.l.b16 %v145
    %v243 = vpack.c.b16 %v198, %v195
    %v244 = vpack.c.b16 %v199, %v196
    %v245 = vpack.c.b16 %v200, %v197
    %v246 = vpack.c.b16 %v204, %v201
    %v247 = vpack.c.b16 %v205, %v202
    %v248 = vpack.c.b16 %v206, %v203
    %v249 = vpack.c.b16 %v210, %v207
    %v250 = vpack.c.b16 %v211, %v208
    %v251 = vpack.c.b16 %v212, %v209
    %v252 = vpack.c.b16 %v216, %v213
    %v253 = vpack.c.b16 %v217, %v214
    %v254 = vpack.c.b16 %v218, %v215
    %v255 = vpack.c.b16 %v222, %v219
    %v256 = vpack.c.b16 %v223, %v220
    %v257 = vpack.c.b16 %v224, %v221
    %v258 = vpack.c.b16 %v228, %v225
    %v259 = vpack.c.b16 %v229, %v226
    %v260 = vpack.c.b16 %v230, %v227
    %v261 = vpack.c.b16 %v234, %v231
    %v262 = vpack.c.b16 %v235, %v232
    %v263 = vpack.c.b16 %v236, %v233
    %v264 = vpack.c.b16 %v240, %v237
    %v265 = vpack.c.b16 %v241, %v238
    %v266 = vpack.c.b16 %v242, %v239
    %291 = vmatprep.subr.bf16.mxu0 %v244
    %292 = vmatpush1.bf16.msra.mxu0 %v243
    %293 = vmatprep.subr.bf16.mxu0 %v247
    %294 = vmatpush1.bf16.msra.mxu0 %v246
    %295 = vmatprep.subr.bf16.mxu0 %v250
    %296 = vmatpush1.bf16.msra.mxu0 %v249
    %297 = vmatprep.subr.bf16.mxu0 %v253
    %298 = vmatpush1.bf16.msra.mxu0 %v252
    %299 = vmatprep.subr.bf16.mxu0 %v256
    %300 = vmatpush1.bf16.msra.mxu0 %v255
    %301 = vmatprep.subr.bf16.mxu0 %v259
    %302 = vmatpush1.bf16.msra.mxu0 %v258
    %303 = vmatprep.subr.bf16.mxu0 %v262
    %304 = vmatpush1.bf16.msra.mxu0 %v261
    %305 = vmatprep.subr.bf16.mxu0 %v265
    %306 = vmatpush1.bf16.msra.mxu0 %v264
    %307 = vmatprep.subr.bf16.mxu0 0
    %308 = vmatpush1.bf16.msra.mxu0 0
    %309 = vmatprep.subr.bf16.mxu0 0
    %310 = vmatpush1.bf16.msra.mxu0 0
    %311 = vmatprep.subr.bf16.mxu0 0
    %312 = vmatpush1.bf16.msra.mxu0 0
    %313 = vmatprep.subr.bf16.mxu0 0
    %314 = vmatpush1.bf16.msra.mxu0 0
    %315 = vmatprep.subr.bf16.mxu0 0
    %316 = vmatpush1.bf16.msra.mxu0 0
    %317 = vmatprep.subr.bf16.mxu0 0
    %318 = vmatpush1.bf16.msra.mxu0 0
    %319 = vmatprep.subr.bf16.mxu0 0
    %320 = vmatpush1.bf16.msra.mxu0 0
    %321 = vmatprep.subr.bf16.mxu0 0
    %322 = vmatpush1.bf16.msra.mxu0 0
    %323 = vmatprep.mubr.bf16.mxu0 0
    %324 = vmatmul.mubr.bf16.gmra.mrb[0].mxu0 %v110
    %v325 = vpop.f32.mrb[0].mxu0
    %v326 = vadd.f32 %v151, %v325
    %v327 = vpop.f32.mrb[0].mxu0
    %v328 = vadd.f32 %v155, %v327
    %v329 = vpop.f32.mrb[0].mxu0
    %v330 = vadd.f32 %v151, %v329
    %v331 = vpop.f32.mrb[0].mxu0
    %v332 = vadd.f32 %v155, %v331
    %333 = vmatprep.mubr.bf16.mxu0 0
    %334 = vmatmul.mubr.bf16.gmra.mrb[0].mxu0 %v111
    %v335 = vpop.f32.mrb[0].mxu0
    %v336 = vadd.f32 %v151, %v335
    %v337 = vpop.f32.mrb[0].mxu0
    %v338 = vadd.f32 %v155, %v337
    %v339 = vpop.f32.mrb[0].mxu0
    %v340 = vadd.f32 %v151, %v339
    %v341 = vpop.f32.mrb[0].mxu0
    %v342 = vadd.f32 %v155, %v341
    %343 = vmatprep.mubr.bf16.mxu0 0
    %344 = vmatmul.mubr.bf16.gmra.mrb[0].mxu0 %v112
    %v345 = vpop.f32.mrb[0].mxu0
    %v346 = vadd.f32 %v151, %v345
    %v347 = vpop.f32.mrb[0].mxu0
    %v348 = vadd.f32 %v155, %v347
    %v349 = vpop.f32.mrb[0].mxu0
    %v350 = vadd.f32 %v151, %v349
    %v351 = vpop.f32.mrb[0].mxu0
    %v352 = vadd.f32 %v155, %v351
    %353 = vmatprep.mubr.bf16.mxu0 0
    %354 = vmatmul.mubr.bf16.gmra.mrb[0].mxu0 %v113
    %v355 = vpop.f32.mrb[0].mxu0
    %v356 = vadd.f32 %v151, %v355
    %v357 = vpop.f32.mrb[0].mxu0
    %v358 = vadd.f32 %v155, %v357
    %v359 = vpop.f32.mrb[0].mxu0
    %v360 = vadd.f32 %v151, %v359
    %v361 = vpop.f32.mrb[0].mxu0
    %v362 = vadd.f32 %v155, %v361
    %363 = vdwg.mxu0
    %364 = vmatprep.subr.bf16.mxu0 0
    %365 = vmatpush1.bf16.msra.mxu0 %v245
    %366 = vmatprep.subr.bf16.mxu0 0
    %367 = vmatpush1.bf16.msra.mxu0 %v248
    %368 = vmatprep.subr.bf16.mxu0 0
    %369 = vmatpush1.bf16.msra.mxu0 %v251
    %370 = vmatprep.subr.bf16.mxu0 0
    %371 = vmatpush1.bf16.msra.mxu0 %v254
    %372 = vmatprep.subr.bf16.mxu0 0
    %373 = vmatpush1.bf16.msra.mxu0 %v257
    %374 = vmatprep.subr.bf16.mxu0 0
    %375 = vmatpush1.bf16.msra.mxu0 %v260
    %376 = vmatprep.subr.bf16.mxu0 0
    %377 = vmatpush1.bf16.msra.mxu0 %v263
    %378 = vmatprep.subr.bf16.mxu0 0
    %379 = vmatpush1.bf16.msra.mxu0 %v266
    %380 = vmatprep.subr.bf16.mxu0 0
    %381 = vmatpush1.bf16.msra.mxu0 0
    %382 = vmatprep.subr.bf16.mxu0 0
    %383 = vmatpush1.bf16.msra.mxu0 0
    %384 = vmatprep.subr.bf16.mxu0 0
    %385 = vmatpush1.bf16.msra.mxu0 0
    %386 = vmatprep.subr.bf16.mxu0 0
    %387 = vmatpush1.bf16.msra.mxu0 0
    %388 = vmatprep.subr.bf16.mxu0 0
    %389 = vmatpush1.bf16.msra.mxu0 0
    %390 = vmatprep.subr.bf16.mxu0 0
    %391 = vmatpush1.bf16.msra.mxu0 0
    %392 = vmatprep.subr.bf16.mxu0 0
    %393 = vmatpush1.bf16.msra.mxu0 0
    %394 = vmatprep.subr.bf16.mxu0 0
    %395 = vmatpush1.bf16.msra.mxu0 0
    %396 = vmatprep.mubr.bf16.mxu0 0
    %397 = vmatmul.mubr.bf16.gmra.mrb[0].mxu0 %v110
    %v398 = vpop.f32.mrb[0].mxu0
    %v399 = vadd.f32 %v159, %v398
    %v400 = vpop.f32.mrb[0].mxu0
    %v401 = vpop.f32.mrb[0].mxu0
    %v402 = vadd.f32 %v159, %v401
    %v403 = vpop.f32.mrb[0].mxu0
    %404 = vmatprep.mubr.bf16.mxu0 0
    %405 = vmatmul.mubr.bf16.gmra.mrb[0].mxu0 %v111
    %v406 = vpop.f32.mrb[0].mxu0
    %v407 = vadd.f32 %v159, %v406
    %v408 = vpop.f32.mrb[0].mxu0
    %v409 = vpop.f32.mrb[0].mxu0
    %v410 = vadd.f32 %v159, %v409
    %v411 = vpop.f32.mrb[0].mxu0
    %412 = vmatprep.mubr.bf16.mxu0 0
    %413 = vmatmul.mubr.bf16.gmra.mrb[0].mxu0 %v112
    %v414 = vpop.f32.mrb[0].mxu0
    %v415 = vadd.f32 %v159, %v414
    %v416 = vpop.f32.mrb[0].mxu0
    %v417 = vpop.f32.mrb[0].mxu0
    %v418 = vadd.f32 %v159, %v417
    %v419 = vpop.f32.mrb[0].mxu0
    %420 = vmatprep.mubr.bf16.mxu0 0
    %421 = vmatmul.mubr.bf16.gmra.mrb[0].mxu0 %v113
    %v422 = vpop.f32.mrb[0].mxu0
    %v423 = vadd.f32 %v159, %v422
    %v424 = vpop.f32.mrb[0].mxu0
    %v425 = vpop.f32.mrb[0].mxu0
    %v426 = vadd.f32 %v159, %v425
    %v427 = vpop.f32.mrb[0].mxu0
    %428 = vdwg.mxu0
    %v429 = vmul.f32 %v326, 0.01
    %v430 = vmul.f32 %v328, 0.01
    %v431 = vmul.f32 %v399, 0.01
    %v432 = vmul.f32 %v330, 0.01
    %v433 = vmul.f32 %v332, 0.01
    %v434 = vmul.f32 %v402, 0.01
    %v435 = vmul.f32 %v336, 0.01
    %v436 = vmul.f32 %v338, 0.01
    %v437 = vmul.f32 %v407, 0.01
    %v438 = vmul.f32 %v340, 0.01
    %v439 = vmul.f32 %v342, 0.01
    %v440 = vmul.f32 %v410, 0.01
    %v441 = vmul.f32 %v346, 0.01
    %v442 = vmul.f32 %v348, 0.01
    %v443 = vmul.f32 %v415, 0.01
    %v444 = vmul.f32 %v350, 0.01
    %v445 = vmul.f32 %v352, 0.01
    %v446 = vmul.f32 %v418, 0.01
    %v447 = vmul.f32 %v356, 0.01
    %v448 = vmul.f32 %v358, 0.01
    %v449 = vmul.f32 %v423, 0.01
    %v450 = vmul.f32 %v360, 0.01
    %v451 = vmul.f32 %v362, 0.01
    %v452 = vmul.f32 %v426, 0.01
    %v453 = vmax.f32 %v326, %v429
    %v454 = vmax.f32 %v328, %v430
    %v455 = vmax.f32 %v399, %v431
    %v456 = vmax.f32 %v330, %v432
    %v457 = vmax.f32 %v332, %v433
    %v458 = vmax.f32 %v402, %v434
    %v459 = vmax.f32 %v336, %v435
    %v460 = vmax.f32 %v338, %v436
    %v461 = vmax.f32 %v407, %v437
    %v462 = vmax.f32 %v340, %v438
    %v463 = vmax.f32 %v342, %v439
    %v464 = vmax.f32 %v410, %v440
    %v465 = vmax.f32 %v346, %v441
    %v466 = vmax.f32 %v348, %v442
    %v467 = vmax.f32 %v415, %v443
    %v468 = vmax.f32 %v350, %v444
    %v469 = vmax.f32 %v352, %v445
    %v470 = vmax.f32 %v418, %v446
    %v471 = vmax.f32 %v356, %v447
    %v472 = vmax.f32 %v358, %v448
    %v473 = vmax.f32 %v423, %v449
    %v474 = vmax.f32 %v360, %v450
    %v475 = vmax.f32 %v362, %v451
    %v476 = vmax.f32 %v426, %v452
    %v477 = vpack.c.bf16 %v456, %v453
    %v478 = vpack.c.bf16 %v457, %v454
    %v479 = vpack.c.bf16 %v458, %v455
    %v480 = vpack.c.bf16 %v462, %v459
    %v481 = vpack.c.bf16 %v463, %v460
    %v482 = vpack.c.bf16 %v464, %v461
    %v483 = vpack.c.bf16 %v468, %v465
    %v484 = vpack.c.bf16 %v469, %v466
    %v485 = vpack.c.bf16 %v470, %v467
    %v486 = vpack.c.bf16 %v474, %v471
    %v487 = vpack.c.bf16 %v475, %v472
    %v488 = vpack.c.bf16 %v476, %v473
    %v489 = vld [vmem:[#allocation7] sm:$0xf]
    %v490 = vld [vmem:[#allocation7 + $0x4] sm:$0xf]
    %v491 = vld [vmem:[#allocation7 + $0x8] sm:$0xf]
    %v492 = vld [vmem:[#allocation7 + $0xc] sm:$0xf]
    %v493 = vld [vmem:[#allocation7 + $0x10] sm:$0xf]
    %v494 = vld [vmem:[#allocation7 + $0x14] sm:$0xf]
    %v495 = vld [vmem:[#allocation7 + $0x18] sm:$0xf]
    %v496 = vld [vmem:[#allocation7 + $0x1c] sm:$0xf]
    %v497 = vld [vmem:[#allocation7 + $0x20] sm:$0xf]
    %v498 = vld [vmem:[#allocation7 + $0x24] sm:$0xf]
    %v499 = vld [vmem:[#allocation7 + $0x28] sm:$0xf]
    %v500 = vld [vmem:[#allocation7 + $0x2c] sm:$0xf]
    %v501 = vld [vmem:[#allocation7 + $0x30] sm:$0xf]
    %v502 = vld [vmem:[#allocation7 + $0x34] sm:$0xf]
    %v503 = vld [vmem:[#allocation7 + $0x38] sm:$0xf]
    %v504 = vld [vmem:[#allocation7 + $0x3c] sm:$0xf]
    %v505 = vld [vmem:[#allocation7 + $0x40] sm:$0xf]
    %v506 = vld [vmem:[#allocation7 + $0x44] sm:$0xf]
    %v507 = vld [vmem:[#allocation7 + $0x48] sm:$0xf]
    %v508 = vld [vmem:[#allocation7 + $0x4c] sm:$0xf]
    %v509 = vld [vmem:[#allocation7 + $0x50] sm:$0xf]
    %v510 = vld [vmem:[#allocation7 + $0x54] sm:$0xf]
    %v511 = vld [vmem:[#allocation7 + $0x58] sm:$0xf]
    %v512 = vld [vmem:[#allocation7 + $0x5c] sm:$0xf]
    %v513 = vld [vmem:[#allocation7 + $0x60] sm:$0xf]
    %v514 = vld [vmem:[#allocation7 + $0x64] sm:$0xf]
    %v515 = vld [vmem:[#allocation7 + $0x68] sm:$0xf]
    %v516 = vld [vmem:[#allocation7 + $0x6c] sm:$0xf]
    %v517 = vld [vmem:[#allocation7 + $0x70] sm:$0xf]
    %v518 = vld [vmem:[#allocation7 + $0x74] sm:$0xf]
    %v519 = vld [vmem:[#allocation7 + $0x78] sm:$0xf]
    %v520 = vld [vmem:[#allocation7 + $0x7c] sm:$0xf]
    %v521 = vld [vmem:[#allocation7 + $0x80] sm:$0xf]
    %v522 = vld [vmem:[#allocation7 + $0x84] sm:$0xf]
    %v523 = vld [vmem:[#allocation7 + $0x88] sm:$0xf]
    %v524 = vld [vmem:[#allocation7 + $0x8c] sm:$0xf]
    %v525 = vld [vmem:[#allocation7 + $0x90] sm:$0xf]
    %v526 = vld [vmem:[#allocation7 + $0x94] sm:$0xf]
    %v527 = vld [vmem:[#allocation7 + $0x98] sm:$0xf]
    %v528 = vld [vmem:[#allocation7 + $0x9c] sm:$0xf]
    %v529 = vld [vmem:[#allocation7 + $0xa0] sm:$0xf]
    %v530 = vld [vmem:[#allocation7 + $0xa4] sm:$0xf]
    %v531 = vld [vmem:[#allocation7 + $0xa8] sm:$0xf]
    %v532 = vld [vmem:[#allocation7 + $0xac] sm:$0xf]
    %v533 = vld [vmem:[#allocation7 + $0xb0] sm:$0xf]
    %v534 = vld [vmem:[#allocation7 + $0xb4] sm:$0xf]
    %v535 = vld [vmem:[#allocation7 + $0xb8] sm:$0xf]
    %v536 = vld [vmem:[#allocation7 + $0xbc] sm:$0xf]
    %v537 = vld [vmem:[%s4] sm:$0x1]
    %v539 = vlaneseq
    %v540 = vshrl.u32 %v539, 7
    %v541 = vsub.s32 0, %v540
    %v542 = vrot.slane %v537, %v541
    %v592 = vunpack.c.l.b16 %v489
    %v593 = vunpack.c.l.b16 %v490
    %v594 = vunpack.c.l.b16 %v491
    %v595 = vunpack.c.l.b16 %v492
    %v596 = vunpack.c.l.b16 %v493
    %v597 = vunpack.c.l.b16 %v494
    %v598 = vunpack.c.l.b16 %v495
    %v599 = vunpack.c.l.b16 %v496
    %v600 = vunpack.c.l.b16 %v497
    %v601 = vunpack.c.l.b16 %v498
    %v602 = vunpack.c.l.b16 %v499
    %v603 = vunpack.c.l.b16 %v500
    %v604 = vunpack.c.l.b16 %v501
    %v605 = vunpack.c.l.b16 %v502
    %v606 = vunpack.c.l.b16 %v503
    %v607 = vunpack.c.l.b16 %v504
    %v608 = vunpack.c.l.b16 %v505
    %v609 = vunpack.c.l.b16 %v506
    %v610 = vunpack.c.l.b16 %v507
    %v611 = vunpack.c.l.b16 %v508
    %v612 = vunpack.c.l.b16 %v509
    %v613 = vunpack.c.l.b16 %v510
    %v614 = vunpack.c.l.b16 %v511
    %v615 = vunpack.c.l.b16 %v512
    %v616 = vunpack.c.l.b16 %v513
    %v617 = vunpack.c.l.b16 %v514
    %v618 = vunpack.c.l.b16 %v515
    %v619 = vunpack.c.l.b16 %v516
    %v620 = vunpack.c.l.b16 %v517
    %v621 = vunpack.c.l.b16 %v518
    %v622 = vunpack.c.l.b16 %v519
    %v623 = vunpack.c.l.b16 %v520
    %v624 = vunpack.c.l.b16 %v521
    %v625 = vunpack.c.l.b16 %v522
    %v626 = vunpack.c.l.b16 %v523
    %v627 = vunpack.c.l.b16 %v524
    %v628 = vunpack.c.l.b16 %v525
    %v629 = vunpack.c.l.b16 %v526
    %v630 = vunpack.c.l.b16 %v527
    %v631 = vunpack.c.l.b16 %v528
    %v632 = vunpack.c.l.b16 %v529
    %v633 = vunpack.c.l.b16 %v530
    %v634 = vunpack.c.l.b16 %v531
    %v635 = vunpack.c.l.b16 %v532
    %v636 = vunpack.c.l.b16 %v533
    %v637 = vunpack.c.l.b16 %v534
    %v638 = vunpack.c.l.b16 %v535
    %v639 = vunpack.c.l.b16 %v536
    %v640 = vpack.c.b16 %v593, %v592
    %v641 = vpack.c.b16 %v595, %v594
    %v642 = vpack.c.b16 %v597, %v596
    %v643 = vpack.c.b16 %v599, %v598
    %v644 = vpack.c.b16 %v601, %v600
    %v645 = vpack.c.b16 %v603, %v602
    %v646 = vpack.c.b16 %v605, %v604
    %v647 = vpack.c.b16 %v607, %v606
    %v648 = vpack.c.b16 %v609, %v608
    %v649 = vpack.c.b16 %v611, %v610
    %v650 = vpack.c.b16 %v613, %v612
    %v651 = vpack.c.b16 %v615, %v614
    %v652 = vpack.c.b16 %v617, %v616
    %v653 = vpack.c.b16 %v619, %v618
    %v654 = vpack.c.b16 %v621, %v620
    %v655 = vpack.c.b16 %v623, %v622
    %v656 = vpack.c.b16 %v625, %v624
    %v657 = vpack.c.b16 %v627, %v626
    %v658 = vpack.c.b16 %v629, %v628
    %v659 = vpack.c.b16 %v631, %v630
    %v660 = vpack.c.b16 %v633, %v632
    %v661 = vpack.c.b16 %v635, %v634
    %v662 = vpack.c.b16 %v637, %v636
    %v663 = vpack.c.b16 %v639, %v638
    %688 = vmatprep.subr.bf16.mxu0 0
    %689 = vmatpush1.bf16.msra.mxu0 %v640
    %690 = vmatprep.subr.bf16.mxu0 0
    %691 = vmatpush1.bf16.msra.mxu0 %v641
    %692 = vmatprep.subr.bf16.mxu0 0
    %693 = vmatpush1.bf16.msra.mxu0 %v642
    %694 = vmatprep.subr.bf16.mxu0 0
    %695 = vmatpush1.bf16.msra.mxu0 %v643
    %696 = vmatprep.subr.bf16.mxu0 0
    %697 = vmatpush1.bf16.msra.mxu0 %v644
    %698 = vmatprep.subr.bf16.mxu0 0
    %699 = vmatpush1.bf16.msra.mxu0 %v645
    %700 = vmatprep.subr.bf16.mxu0 0
    %701 = vmatpush1.bf16.msra.mxu0 %v646
    %702 = vmatprep.subr.bf16.mxu0 0
    %703 = vmatpush1.bf16.msra.mxu0 %v647
    %704 = vmatprep.subr.bf16.mxu0 0
    %705 = vmatpush1.bf16.msra.mxu0 %v648
    %706 = vmatprep.subr.bf16.mxu0 0
    %707 = vmatpush1.bf16.msra.mxu0 %v649
    %708 = vmatprep.subr.bf16.mxu0 0
    %709 = vmatpush1.bf16.msra.mxu0 %v650
    %710 = vmatprep.subr.bf16.mxu0 0
    %711 = vmatpush1.bf16.msra.mxu0 %v651
    %712 = vmatprep.subr.bf16.mxu0 0
    %713 = vmatpush1.bf16.msra.mxu0 %v652
    %714 = vmatprep.subr.bf16.mxu0 0
    %715 = vmatpush1.bf16.msra.mxu0 %v653
    %716 = vmatprep.subr.bf16.mxu0 0
    %717 = vmatpush1.bf16.msra.mxu0 %v654
    %718 = vmatprep.subr.bf16.mxu0 0
    %719 = vmatpush1.bf16.msra.mxu0 %v655
    %720 = vmatprep.mubr.bf16.mxu0 %v478
    %721 = vmatmul.mubr.bf16.gmra.mrb[0].mxu0 %v477
    %v722 = vpop.f32.mrb[0].mxu0
    %v723 = vadd.f32 %v542, %v722
    %v724 = vpop.f32.mrb[0].mxu0
    %v725 = vpop.f32.mrb[0].mxu0
    %v726 = vadd.f32 %v542, %v725
    %v727 = vpop.f32.mrb[0].mxu0
    %728 = vmatprep.mubr.bf16.mxu0 %v481
    %729 = vmatmul.mubr.bf16.gmra.mrb[0].mxu0 %v480
    %v730 = vpop.f32.mrb[0].mxu0
    %v731 = vadd.f32 %v542, %v730
    %v732 = vpop.f32.mrb[0].mxu0
    %v733 = vpop.f32.mrb[0].mxu0
    %v734 = vadd.f32 %v542, %v733
    %v735 = vpop.f32.mrb[0].mxu0
    %736 = vmatprep.mubr.bf16.mxu0 %v484
    %737 = vmatmul.mubr.bf16.gmra.mrb[0].mxu0 %v483
    %v738 = vpop.f32.mrb[0].mxu0
    %v739 = vadd.f32 %v542, %v738
    %v740 = vpop.f32.mrb[0].mxu0
    %v741 = vpop.f32.mrb[0].mxu0
    %v742 = vadd.f32 %v542, %v741
    %v743 = vpop.f32.mrb[0].mxu0
    %744 = vmatprep.mubr.bf16.mxu0 %v487
    %745 = vmatmul.mubr.bf16.gmra.mrb[0].mxu0 %v486
    %v746 = vpop.f32.mrb[0].mxu0
    %v747 = vadd.f32 %v542, %v746
    %v748 = vpop.f32.mrb[0].mxu0
    %v749 = vpop.f32.mrb[0].mxu0
    %v750 = vadd.f32 %v542, %v749
    %v751 = vpop.f32.mrb[0].mxu0
    %752 = vdwg.mxu0
    %753 = vmatprep.subr.bf16.mxu0 0
    %754 = vmatpush1.bf16.msra.mxu0 %v656
    %755 = vmatprep.subr.bf16.mxu0 0
    %756 = vmatpush1.bf16.msra.mxu0 %v657
    %757 = vmatprep.subr.bf16.mxu0 0
    %758 = vmatpush1.bf16.msra.mxu0 %v658
    %759 = vmatprep.subr.bf16.mxu0 0
    %760 = vmatpush1.bf16.msra.mxu0 %v659
    %761 = vmatprep.subr.bf16.mxu0 0
    %762 = vmatpush1.bf16.msra.mxu0 %v660
    %763 = vmatprep.subr.bf16.mxu0 0
    %764 = vmatpush1.bf16.msra.mxu0 %v661
    %765 = vmatprep.subr.bf16.mxu0 0
    %766 = vmatpush1.bf16.msra.mxu0 %v662
    %767 = vmatprep.subr.bf16.mxu0 0
    %768 = vmatpush1.bf16.msra.mxu0 %v663
    %769 = vmatprep.subr.bf16.mxu0 0
    %770 = vmatpush1.bf16.msra.mxu0 0
    %771 = vmatprep.subr.bf16.mxu0 0
    %772 = vmatpush1.bf16.msra.mxu0 0
    %773 = vmatprep.subr.bf16.mxu0 0
    %774 = vmatpush1.bf16.msra.mxu0 0
    %775 = vmatprep.subr.bf16.mxu0 0
    %776 = vmatpush1.bf16.msra.mxu0 0
    %777 = vmatprep.subr.bf16.mxu0 0
    %778 = vmatpush1.bf16.msra.mxu0 0
    %779 = vmatprep.subr.bf16.mxu0 0
    %780 = vmatpush1.bf16.msra.mxu0 0
    %781 = vmatprep.subr.bf16.mxu0 0
    %782 = vmatpush1.bf16.msra.mxu0 0
    %783 = vmatprep.subr.bf16.mxu0 0
    %784 = vmatpush1.bf16.msra.mxu0 0
    %785 = vmatprep.mubr.bf16.mxu0 0
    %786 = vmatmul.mubr.bf16.gmra.mrb[0].mxu0 %v479
    %v787 = vpop.f32.mrb[0].mxu0
    %v788 = vadd.f32 %v723, %v787
    %v789 = vpop.f32.mrb[0].mxu0
    %v790 = vpop.f32.mrb[0].mxu0
    %v791 = vadd.f32 %v726, %v790
    %v792 = vpop.f32.mrb[0].mxu0
    %793 = vmatprep.mubr.bf16.mxu0 0
    %794 = vmatmul.mubr.bf16.gmra.mrb[0].mxu0 %v482
    %v795 = vpop.f32.mrb[0].mxu0
    %v796 = vadd.f32 %v731, %v795
    %v797 = vpop.f32.mrb[0].mxu0
    %v798 = vpop.f32.mrb[0].mxu0
    %v799 = vadd.f32 %v734, %v798
    %v800 = vpop.f32.mrb[0].mxu0
    %801 = vmatprep.mubr.bf16.mxu0 0
    %802 = vmatmul.mubr.bf16.gmra.mrb[0].mxu0 %v485
    %v803 = vpop.f32.mrb[0].mxu0
    %v804 = vadd.f32 %v739, %v803
    %v805 = vpop.f32.mrb[0].mxu0
    %v806 = vpop.f32.mrb[0].mxu0
    %v807 = vadd.f32 %v742, %v806
    %v808 = vpop.f32.mrb[0].mxu0
    %809 = vmatprep.mubr.bf16.mxu0 0
    %810 = vmatmul.mubr.bf16.gmra.mrb[0].mxu0 %v488
    %v811 = vpop.f32.mrb[0].mxu0
    %v812 = vadd.f32 %v747, %v811
    %v813 = vpop.f32.mrb[0].mxu0
    %v814 = vpop.f32.mrb[0].mxu0
    %v815 = vadd.f32 %v750, %v814
    %v816 = vpop.f32.mrb[0].mxu0
    %817 = vdwg.mxu0
    %v818 = vmul.f32 %v788, 0.01
    %v819 = vmul.f32 %v791, 0.01
    %v820 = vmul.f32 %v796, 0.01
    %v821 = vmul.f32 %v799, 0.01
    %v822 = vmul.f32 %v804, 0.01
    %v823 = vmul.f32 %v807, 0.01
    %v824 = vmul.f32 %v812, 0.01
    %v825 = vmul.f32 %v815, 0.01
    %v826 = vmax.f32 %v788, %v818
    %v827 = vmax.f32 %v791, %v819
    %v828 = vmax.f32 %v796, %v820
    %v829 = vmax.f32 %v799, %v821
    %v830 = vmax.f32 %v804, %v822
    %v831 = vmax.f32 %v807, %v823
    %v832 = vmax.f32 %v812, %v824
    %v833 = vmax.f32 %v815, %v825
    %v834 = vpack.c.bf16 %v827, %v826
    %v835 = vpack.c.bf16 %v829, %v828
    %v836 = vpack.c.bf16 %v831, %v830
    %v837 = vpack.c.bf16 %v833, %v832
    %v838 = vld [vmem:[#allocation8] sm:$0xff]
    %v839 = vld [vmem:[#allocation8 + $0x8] sm:$0xf]
    %v840 = vld [vmem:[#allocation8 + $0xc] sm:$0xff]
    %v841 = vld [vmem:[#allocation8 + $0x14] sm:$0xf]
    %v842 = vld [vmem:[#allocation8 + $0x18] sm:$0xff]
    %v843 = vld [vmem:[#allocation8 + $0x20] sm:$0xf]
    %v844 = vld [vmem:[#allocation8 + $0x24] sm:$0xff]
    %v845 = vld [vmem:[#allocation8 + $0x2c] sm:$0xf]
    %v846 = vld [vmem:[#allocation8 + $0x30] sm:$0xff]
    %v847 = vld [vmem:[#allocation8 + $0x38] sm:$0xf]
    %v848 = vld [vmem:[#allocation8 + $0x3c] sm:$0xff]
    %v849 = vld [vmem:[#allocation8 + $0x44] sm:$0xf]
    %v850 = vld [vmem:[#allocation8 + $0x48] sm:$0xff]
    %v851 = vld [vmem:[#allocation8 + $0x50] sm:$0xf]
    %v852 = vld [vmem:[#allocation8 + $0x54] sm:$0xff]
    %v853 = vld [vmem:[#allocation8 + $0x5c] sm:$0xf]
    %v854 = vld [vmem:[#allocation8 + $0x60] sm:$0xff]
    %v855 = vld [vmem:[#allocation8 + $0x68] sm:$0xf]
    %v856 = vld [vmem:[#allocation8 + $0x6c] sm:$0xff]
    %v857 = vld [vmem:[#allocation8 + $0x74] sm:$0xf]
    %v858 = vld [vmem:[#allocation8 + $0x78] sm:$0xff]
    %v859 = vld [vmem:[#allocation8 + $0x80] sm:$0xf]
    %v860 = vld [vmem:[#allocation8 + $0x84] sm:$0xff]
    %v861 = vld [vmem:[#allocation8 + $0x8c] sm:$0xf]
    %v862 = vld [vmem:[#allocation8 + $0x90] sm:$0xff]
    %v863 = vld [vmem:[#allocation8 + $0x98] sm:$0xf]
    %v864 = vld [vmem:[#allocation8 + $0x9c] sm:$0xff]
    %v865 = vld [vmem:[#allocation8 + $0xa4] sm:$0xf]
    %v866 = vld [vmem:[#allocation8 + $0xa8] sm:$0xff]
    %v867 = vld [vmem:[#allocation8 + $0xb0] sm:$0xf]
    %v868 = vld [vmem:[#allocation8 + $0xb4] sm:$0xff]
    %v869 = vld [vmem:[#allocation8 + $0xbc] sm:$0xf]
    %v870 = vld [vmem:[%s6] sm:$0x7]
    %v872 = vlaneseq
    %v873 = vshrl.u32 %v872, 7
    %v874 = vsub.s32 0, %v873
    %v875 = vrot.slane %v870, %v874
    %v876 = vlaneseq
    %v877 = vshrl.u32 %v876, 7
    %v878 = vsub.s32 1, %v877
    %v879 = vrot.slane %v870, %v878
    %v880 = vlaneseq
    %v881 = vshrl.u32 %v880, 7
    %v882 = vsub.s32 2, %v881
    %v883 = vrot.slane %v870, %v882
    %v919 = vunpack.c.l.b16 %v838
    %v920 = vunpack.c.h.b16 %v838
    %v921 = vunpack.c.l.b16 %v839
    %v922 = vunpack.c.l.b16 %v840
    %v923 = vunpack.c.h.b16 %v840
    %v924 = vunpack.c.l.b16 %v841
    %v925 = vunpack.c.l.b16 %v842
    %v926 = vunpack.c.h.b16 %v842
    %v927 = vunpack.c.l.b16 %v843
    %v928 = vunpack.c.l.b16 %v844
    %v929 = vunpack.c.h.b16 %v844
    %v930 = vunpack.c.l.b16 %v845
    %v931 = vunpack.c.l.b16 %v846
    %v932 = vunpack.c.h.b16 %v846
    %v933 = vunpack.c.l.b16 %v847
    %v934 = vunpack.c.l.b16 %v848
    %v935 = vunpack.c.h.b16 %v848
    %v936 = vunpack.c.l.b16 %v849
    %v937 = vunpack.c.l.b16 %v850
    %v938 = vunpack.c.h.b16 %v850
    %v939 = vunpack.c.l.b16 %v851
    %v940 = vunpack.c.l.b16 %v852
    %v941 = vunpack.c.h.b16 %v852
    %v942 = vunpack.c.l.b16 %v853
    %v943 = vunpack.c.l.b16 %v854
    %v944 = vunpack.c.h.b16 %v854
    %v945 = vunpack.c.l.b16 %v855
    %v946 = vunpack.c.l.b16 %v856
    %v947 = vunpack.c.h.b16 %v856
    %v948 = vunpack.c.l.b16 %v857
    %v949 = vunpack.c.l.b16 %v858
    %v950 = vunpack.c.h.b16 %v858
    %v951 = vunpack.c.l.b16 %v859
    %v952 = vunpack.c.l.b16 %v860
    %v953 = vunpack.c.h.b16 %v860
    %v954 = vunpack.c.l.b16 %v861
    %v955 = vunpack.c.l.b16 %v862
    %v956 = vunpack.c.h.b16 %v862
    %v957 = vunpack.c.l.b16 %v863
    %v958 = vunpack.c.l.b16 %v864
    %v959 = vunpack.c.h.b16 %v864
    %v960 = vunpack.c.l.b16 %v865
    %v961 = vunpack.c.l.b16 %v866
    %v962 = vunpack.c.h.b16 %v866
    %v963 = vunpack.c.l.b16 %v867
    %v964 = vunpack.c.l.b16 %v868
    %v965 = vunpack.c.h.b16 %v868
    %v966 = vunpack.c.l.b16 %v869
    %v967 = vpack.c.b16 %v922, %v919
    %v968 = vpack.c.b16 %v923, %v920
    %v969 = vpack.c.b16 %v924, %v921
    %v970 = vpack.c.b16 %v928, %v925
    %v971 = vpack.c.b16 %v929, %v926
    %v972 = vpack.c.b16 %v930, %v927
    %v973 = vpack.c.b16 %v934, %v931
    %v974 = vpack.c.b16 %v935, %v932
    %v975 = vpack.c.b16 %v936, %v933
    %v976 = vpack.c.b16 %v940, %v937
    %v977 = vpack.c.b16 %v941, %v938
    %v978 = vpack.c.b16 %v942, %v939
    %v979 = vpack.c.b16 %v946, %v943
    %v980 = vpack.c.b16 %v947, %v944
    %v981 = vpack.c.b16 %v948, %v945
    %v982 = vpack.c.b16 %v952, %v949
    %v983 = vpack.c.b16 %v953, %v950
    %v984 = vpack.c.b16 %v954, %v951
    %v985 = vpack.c.b16 %v958, %v955
    %v986 = vpack.c.b16 %v959, %v956
    %v987 = vpack.c.b16 %v960, %v957
    %v988 = vpack.c.b16 %v964, %v961
    %v989 = vpack.c.b16 %v965, %v962
    %v990 = vpack.c.b16 %v966, %v963
    %1015 = vmatprep.subr.bf16.mxu0 %v968
    %1016 = vmatpush1.bf16.msra.mxu0 %v967
    %1017 = vmatprep.subr.bf16.mxu0 %v971
    %1018 = vmatpush1.bf16.msra.mxu0 %v970
    %1019 = vmatprep.subr.bf16.mxu0 %v974
    %1020 = vmatpush1.bf16.msra.mxu0 %v973
    %1021 = vmatprep.subr.bf16.mxu0 %v977
    %1022 = vmatpush1.bf16.msra.mxu0 %v976
    %1023 = vmatprep.subr.bf16.mxu0 %v980
    %1024 = vmatpush1.bf16.msra.mxu0 %v979
    %1025 = vmatprep.subr.bf16.mxu0 %v983
    %1026 = vmatpush1.bf16.msra.mxu0 %v982
    %1027 = vmatprep.subr.bf16.mxu0 %v986
    %1028 = vmatpush1.bf16.msra.mxu0 %v985
    %1029 = vmatprep.subr.bf16.mxu0 %v989
    %1030 = vmatpush1.bf16.msra.mxu0 %v988
    %1031 = vmatprep.subr.bf16.mxu0 0
    %1032 = vmatpush1.bf16.msra.mxu0 0
    %1033 = vmatprep.subr.bf16.mxu0 0
    %1034 = vmatpush1.bf16.msra.mxu0 0
    %1035 = vmatprep.subr.bf16.mxu0 0
    %1036 = vmatpush1.bf16.msra.mxu0 0
    %1037 = vmatprep.subr.bf16.mxu0 0
    %1038 = vmatpush1.bf16.msra.mxu0 0
    %1039 = vmatprep.subr.bf16.mxu0 0
    %1040 = vmatpush1.bf16.msra.mxu0 0
    %1041 = vmatprep.subr.bf16.mxu0 0
    %1042 = vmatpush1.bf16.msra.mxu0 0
    %1043 = vmatprep.subr.bf16.mxu0 0
    %1044 = vmatpush1.bf16.msra.mxu0 0
    %1045 = vmatprep.subr.bf16.mxu0 0
    %1046 = vmatpush1.bf16.msra.mxu0 0
    %1047 = vmatprep.mubr.bf16.mxu0 0
    %1048 = vmatmul.mubr.bf16.gmra.mrb[0].mxu0 %v834
    %v1049 = vpop.f32.mrb[0].mxu0
    %v1050 = vadd.f32 %v875, %v1049
    %v1051 = vpop.f32.mrb[0].mxu0
    %v1052 = vadd.f32 %v879, %v1051
    %v1053 = vpop.f32.mrb[0].mxu0
    %v1054 = vadd.f32 %v875, %v1053
    %v1055 = vpop.f32.mrb[0].mxu0
    %v1056 = vadd.f32 %v879, %v1055
    %1057 = vmatprep.mubr.bf16.mxu0 0
    %1058 = vmatmul.mubr.bf16.gmra.mrb[0].mxu0 %v835
    %v1059 = vpop.f32.mrb[0].mxu0
    %v1060 = vadd.f32 %v875, %v1059
    %v1061 = vpop.f32.mrb[0].mxu0
    %v1062 = vadd.f32 %v879, %v1061
    %v1063 = vpop.f32.mrb[0].mxu0
    %v1064 = vadd.f32 %v875, %v1063
    %v1065 = vpop.f32.mrb[0].mxu0
    %v1066 = vadd.f32 %v879, %v1065
    %1067 = vmatprep.mubr.bf16.mxu0 0
    %1068 = vmatmul.mubr.bf16.gmra.mrb[0].mxu0 %v836
    %v1069 = vpop.f32.mrb[0].mxu0
    %v1070 = vadd.f32 %v875, %v1069
    %v1071 = vpop.f32.mrb[0].mxu0
    %v1072 = vadd.f32 %v879, %v1071
    %v1073 = vpop.f32.mrb[0].mxu0
    %v1074 = vadd.f32 %v875, %v1073
    %v1075 = vpop.f32.mrb[0].mxu0
    %v1076 = vadd.f32 %v879, %v1075
    %1077 = vmatprep.mubr.bf16.mxu0 0
    %1078 = vmatmul.mubr.bf16.gmra.mrb[0].mxu0 %v837
    %v1079 = vpop.f32.mrb[0].mxu0
    %v1080 = vadd.f32 %v875, %v1079
    %v1081 = vpop.f32.mrb[0].mxu0
    %v1082 = vadd.f32 %v879, %v1081
    %v1083 = vpop.f32.mrb[0].mxu0
    %v1084 = vadd.f32 %v875, %v1083
    %v1085 = vpop.f32.mrb[0].mxu0
    %v1086 = vadd.f32 %v879, %v1085
    %1087 = vdwg.mxu0
    %1088 = vmatprep.subr.bf16.mxu0 0
    %1089 = vmatpush1.bf16.msra.mxu0 %v969
    %1090 = vmatprep.subr.bf16.mxu0 0
    %1091 = vmatpush1.bf16.msra.mxu0 %v972
    %1092 = vmatprep.subr.bf16.mxu0 0
    %1093 = vmatpush1.bf16.msra.mxu0 %v975
    %1094 = vmatprep.subr.bf16.mxu0 0
    %1095 = vmatpush1.bf16.msra.mxu0 %v978
    %1096 = vmatprep.subr.bf16.mxu0 0
    %1097 = vmatpush1.bf16.msra.mxu0 %v981
    %1098 = vmatprep.subr.bf16.mxu0 0
    %1099 = vmatpush1.bf16.msra.mxu0 %v984
    %1100 = vmatprep.subr.bf16.mxu0 0
    %1101 = vmatpush1.bf16.msra.mxu0 %v987
    %1102 = vmatprep.subr.bf16.mxu0 0
    %1103 = vmatpush1.bf16.msra.mxu0 %v990
    %1104 = vmatprep.subr.bf16.mxu0 0
    %1105 = vmatpush1.bf16.msra.mxu0 0
    %1106 = vmatprep.subr.bf16.mxu0 0
    %1107 = vmatpush1.bf16.msra.mxu0 0
    %1108 = vmatprep.subr.bf16.mxu0 0
    %1109 = vmatpush1.bf16.msra.mxu0 0
    %1110 = vmatprep.subr.bf16.mxu0 0
    %1111 = vmatpush1.bf16.msra.mxu0 0
    %1112 = vmatprep.subr.bf16.mxu0 0
    %1113 = vmatpush1.bf16.msra.mxu0 0
    %1114 = vmatprep.subr.bf16.mxu0 0
    %1115 = vmatpush1.bf16.msra.mxu0 0
    %1116 = vmatprep.subr.bf16.mxu0 0
    %1117 = vmatpush1.bf16.msra.mxu0 0
    %1118 = vmatprep.subr.bf16.mxu0 0
    %1119 = vmatpush1.bf16.msra.mxu0 0
    %1120 = vmatprep.mubr.bf16.mxu0 0
    %1121 = vmatmul.mubr.bf16.gmra.mrb[0].mxu0 %v834
    %v1122 = vpop.f32.mrb[0].mxu0
    %v1123 = vadd.f32 %v883, %v1122
    %v1124 = vpop.f32.mrb[0].mxu0
    %v1125 = vpop.f32.mrb[0].mxu0
    %v1126 = vadd.f32 %v883, %v1125
    %v1127 = vpop.f32.mrb[0].mxu0
    %1128 = vmatprep.mubr.bf16.mxu0 0
    %1129 = vmatmul.mubr.bf16.gmra.mrb[0].mxu0 %v835
    %v1130 = vpop.f32.mrb[0].mxu0
    %v1131 = vadd.f32 %v883, %v1130
    %v1132 = vpop.f32.mrb[0].mxu0
    %v1133 = vpop.f32.mrb[0].mxu0
    %v1134 = vadd.f32 %v883, %v1133
    %v1135 = vpop.f32.mrb[0].mxu0
    %1136 = vmatprep.mubr.bf16.mxu0 0
    %1137 = vmatmul.mubr.bf16.gmra.mrb[0].mxu0 %v836
    %v1138 = vpop.f32.mrb[0].mxu0
    %v1139 = vadd.f32 %v883, %v1138
    %v1140 = vpop.f32.mrb[0].mxu0
    %v1141 = vpop.f32.mrb[0].mxu0
    %v1142 = vadd.f32 %v883, %v1141
    %v1143 = vpop.f32.mrb[0].mxu0
    %1144 = vmatprep.mubr.bf16.mxu0 0
    %1145 = vmatmul.mubr.bf16.gmra.mrb[0].mxu0 %v837
    %v1146 = vpop.f32.mrb[0].mxu0
    %v1147 = vadd.f32 %v883, %v1146
    %v1148 = vpop.f32.mrb[0].mxu0
    %v1149 = vpop.f32.mrb[0].mxu0
    %v1150 = vadd.f32 %v883, %v1149
    %v1151 = vpop.f32.mrb[0].mxu0
    %1152 = vdwg.mxu0
    %v1153 = vmul.f32 %v1050, 0.01
    %v1154 = vmul.f32 %v1052, 0.01
    %v1155 = vmul.f32 %v1123, 0.01
    %v1156 = vmul.f32 %v1054, 0.01
    %v1157 = vmul.f32 %v1056, 0.01
    %v1158 = vmul.f32 %v1126, 0.01
    %v1159 = vmul.f32 %v1060, 0.01
    %v1160 = vmul.f32 %v1062, 0.01
    %v1161 = vmul.f32 %v1131, 0.01
    %v1162 = vmul.f32 %v1064, 0.01
    %v1163 = vmul.f32 %v1066, 0.01
    %v1164 = vmul.f32 %v1134, 0.01
    %v1165 = vmul.f32 %v1070, 0.01
    %v1166 = vmul.f32 %v1072, 0.01
    %v1167 = vmul.f32 %v1139, 0.01
    %v1168 = vmul.f32 %v1074, 0.01
    %v1169 = vmul.f32 %v1076, 0.01
    %v1170 = vmul.f32 %v1142, 0.01
    %v1171 = vmul.f32 %v1080, 0.01
    %v1172 = vmul.f32 %v1082, 0.01
    %v1173 = vmul.f32 %v1147, 0.01
    %v1174 = vmul.f32 %v1084, 0.01
    %v1175 = vmul.f32 %v1086, 0.01
    %v1176 = vmul.f32 %v1150, 0.01
    %v1177 = vmax.f32 %v1050, %v1153
    %v1178 = vmax.f32 %v1052, %v1154
    %v1179 = vmax.f32 %v1123, %v1155
    %v1180 = vmax.f32 %v1054, %v1156
    %v1181 = vmax.f32 %v1056, %v1157
    %v1182 = vmax.f32 %v1126, %v1158
    %v1183 = vmax.f32 %v1060, %v1159
    %v1184 = vmax.f32 %v1062, %v1160
    %v1185 = vmax.f32 %v1131, %v1161
    %v1186 = vmax.f32 %v1064, %v1162
    %v1187 = vmax.f32 %v1066, %v1163
    %v1188 = vmax.f32 %v1134, %v1164
    %v1189 = vmax.f32 %v1070, %v1165
    %v1190 = vmax.f32 %v1072, %v1166
    %v1191 = vmax.f32 %v1139, %v1167
    %v1192 = vmax.f32 %v1074, %v1168
    %v1193 = vmax.f32 %v1076, %v1169
    %v1194 = vmax.f32 %v1142, %v1170
    %v1195 = vmax.f32 %v1080, %v1171
    %v1196 = vmax.f32 %v1082, %v1172
    %v1197 = vmax.f32 %v1147, %v1173
    %v1198 = vmax.f32 %v1084, %v1174
    %v1199 = vmax.f32 %v1086, %v1175
    %v1200 = vmax.f32 %v1150, %v1176
    %v1201 = vpack.c.bf16 %v1180, %v1177
    %v1202 = vpack.c.bf16 %v1181, %v1178
    %v1203 = vpack.c.bf16 %v1182, %v1179
    %v1204 = vpack.c.bf16 %v1186, %v1183
    %v1205 = vpack.c.bf16 %v1187, %v1184
    %v1206 = vpack.c.bf16 %v1188, %v1185
    %v1207 = vpack.c.bf16 %v1192, %v1189
    %v1208 = vpack.c.bf16 %v1193, %v1190
    %v1209 = vpack.c.bf16 %v1194, %v1191
    %v1210 = vpack.c.bf16 %v1198, %v1195
    %v1211 = vpack.c.bf16 %v1199, %v1196
    %v1212 = vpack.c.bf16 %v1200, %v1197
    %v1213 = vld [vmem:[#allocation10] sm:$0xf]
    %v1214 = vld [vmem:[#allocation10 + $0x4] sm:$0xf]
    %v1215 = vld [vmem:[#allocation10 + $0x8] sm:$0xf]
    %v1216 = vld [vmem:[#allocation10 + $0xc] sm:$0xf]
    %v1217 = vld [vmem:[#allocation10 + $0x10] sm:$0xf]
    %v1218 = vld [vmem:[#allocation10 + $0x14] sm:$0xf]
    %v1219 = vld [vmem:[#allocation10 + $0x18] sm:$0xf]
    %v1220 = vld [vmem:[#allocation10 + $0x1c] sm:$0xf]
    %v1221 = vld [vmem:[#allocation10 + $0x20] sm:$0xf]
    %v1222 = vld [vmem:[#allocation10 + $0x24] sm:$0xf]
    %v1223 = vld [vmem:[#allocation10 + $0x28] sm:$0xf]
    %v1224 = vld [vmem:[#allocation10 + $0x2c] sm:$0xf]
    %v1225 = vld [vmem:[#allocation10 + $0x30] sm:$0xf]
    %v1226 = vld [vmem:[#allocation10 + $0x34] sm:$0xf]
    %v1227 = vld [vmem:[#allocation10 + $0x38] sm:$0xf]
    %v1228 = vld [vmem:[#allocation10 + $0x3c] sm:$0xf]
    %v1229 = vld [vmem:[#allocation10 + $0x40] sm:$0xf]
    %v1230 = vld [vmem:[#allocation10 + $0x44] sm:$0xf]
    %v1231 = vld [vmem:[#allocation10 + $0x48] sm:$0xf]
    %v1232 = vld [vmem:[#allocation10 + $0x4c] sm:$0xf]
    %v1233 = vld [vmem:[#allocation10 + $0x50] sm:$0xf]
    %v1234 = vld [vmem:[#allocation10 + $0x54] sm:$0xf]
    %v1235 = vld [vmem:[#allocation10 + $0x58] sm:$0xf]
    %v1236 = vld [vmem:[#allocation10 + $0x5c] sm:$0xf]
    %v1237 = vld [vmem:[#allocation10 + $0x60] sm:$0xf]
    %v1238 = vld [vmem:[#allocation10 + $0x64] sm:$0xf]
    %v1239 = vld [vmem:[#allocation10 + $0x68] sm:$0xf]
    %v1240 = vld [vmem:[#allocation10 + $0x6c] sm:$0xf]
    %v1241 = vld [vmem:[#allocation10 + $0x70] sm:$0xf]
    %v1242 = vld [vmem:[#allocation10 + $0x74] sm:$0xf]
    %v1243 = vld [vmem:[#allocation10 + $0x78] sm:$0xf]
    %v1244 = vld [vmem:[#allocation10 + $0x7c] sm:$0xf]
    %v1245 = vld [vmem:[#allocation10 + $0x80] sm:$0xf]
    %v1246 = vld [vmem:[#allocation10 + $0x84] sm:$0xf]
    %v1247 = vld [vmem:[#allocation10 + $0x88] sm:$0xf]
    %v1248 = vld [vmem:[#allocation10 + $0x8c] sm:$0xf]
    %v1249 = vld [vmem:[#allocation10 + $0x90] sm:$0xf]
    %v1250 = vld [vmem:[#allocation10 + $0x94] sm:$0xf]
    %v1251 = vld [vmem:[#allocation10 + $0x98] sm:$0xf]
    %v1252 = vld [vmem:[#allocation10 + $0x9c] sm:$0xf]
    %v1253 = vld [vmem:[#allocation10 + $0xa0] sm:$0xf]
    %v1254 = vld [vmem:[#allocation10 + $0xa4] sm:$0xf]
    %v1255 = vld [vmem:[#allocation10 + $0xa8] sm:$0xf]
    %v1256 = vld [vmem:[#allocation10 + $0xac] sm:$0xf]
    %v1257 = vld [vmem:[#allocation10 + $0xb0] sm:$0xf]
    %v1258 = vld [vmem:[#allocation10 + $0xb4] sm:$0xf]
    %v1259 = vld [vmem:[#allocation10 + $0xb8] sm:$0xf]
    %v1260 = vld [vmem:[#allocation10 + $0xbc] sm:$0xf]
    %v1261 = vld [vmem:[%s8] sm:$0x1]
    %v1263 = vlaneseq
    %v1264 = vshrl.u32 %v1263, 7
    %v1265 = vsub.s32 0, %v1264
    %v1266 = vrot.slane %v1261, %v1265
    %v1316 = vunpack.c.l.b16 %v1213
    %v1317 = vunpack.c.l.b16 %v1214
    %v1318 = vunpack.c.l.b16 %v1215
    %v1319 = vunpack.c.l.b16 %v1216
    %v1320 = vunpack.c.l.b16 %v1217
    %v1321 = vunpack.c.l.b16 %v1218
    %v1322 = vunpack.c.l.b16 %v1219
    %v1323 = vunpack.c.l.b16 %v1220
    %v1324 = vunpack.c.l.b16 %v1221
    %v1325 = vunpack.c.l.b16 %v1222
    %v1326 = vunpack.c.l.b16 %v1223
    %v1327 = vunpack.c.l.b16 %v1224
    %v1328 = vunpack.c.l.b16 %v1225
    %v1329 = vunpack.c.l.b16 %v1226
    %v1330 = vunpack.c.l.b16 %v1227
    %v1331 = vunpack.c.l.b16 %v1228
    %v1332 = vunpack.c.l.b16 %v1229
    %v1333 = vunpack.c.l.b16 %v1230
    %v1334 = vunpack.c.l.b16 %v1231
    %v1335 = vunpack.c.l.b16 %v1232
    %v1336 = vunpack.c.l.b16 %v1233
    %v1337 = vunpack.c.l.b16 %v1234
    %v1338 = vunpack.c.l.b16 %v1235
    %v1339 = vunpack.c.l.b16 %v1236
    %v1340 = vunpack.c.l.b16 %v1237
    %v1341 = vunpack.c.l.b16 %v1238
    %v1342 = vunpack.c.l.b16 %v1239
    %v1343 = vunpack.c.l.b16 %v1240
    %v1344 = vunpack.c.l.b16 %v1241
    %v1345 = vunpack.c.l.b16 %v1242
    %v1346 = vunpack.c.l.b16 %v1243
    %v1347 = vunpack.c.l.b16 %v1244
    %v1348 = vunpack.c.l.b16 %v1245
    %v1349 = vunpack.c.l.b16 %v1246
    %v1350 = vunpack.c.l.b16 %v1247
    %v1351 = vunpack.c.l.b16 %v1248
    %v1352 = vunpack.c.l.b16 %v1249
    %v1353 = vunpack.c.l.b16 %v1250
    %v1354 = vunpack.c.l.b16 %v1251
    %v1355 = vunpack.c.l.b16 %v1252
    %v1356 = vunpack.c.l.b16 %v1253
    %v1357 = vunpack.c.l.b16 %v1254
    %v1358 = vunpack.c.l.b16 %v1255
    %v1359 = vunpack.c.l.b16 %v1256
    %v1360 = vunpack.c.l.b16 %v1257
    %v1361 = vunpack.c.l.b16 %v1258
    %v1362 = vunpack.c.l.b16 %v1259
    %v1363 = vunpack.c.l.b16 %v1260
    %v1364 = vpack.c.b16 %v1317, %v1316
    %v1365 = vpack.c.b16 %v1319, %v1318
    %v1366 = vpack.c.b16 %v1321, %v1320
    %v1367 = vpack.c.b16 %v1323, %v1322
    %v1368 = vpack.c.b16 %v1325, %v1324
    %v1369 = vpack.c.b16 %v1327, %v1326
    %v1370 = vpack.c.b16 %v1329, %v1328
    %v1371 = vpack.c.b16 %v1331, %v1330
    %v1372 = vpack.c.b16 %v1333, %v1332
    %v1373 = vpack.c.b16 %v1335, %v1334
    %v1374 = vpack.c.b16 %v1337, %v1336
    %v1375 = vpack.c.b16 %v1339, %v1338
    %v1376 = vpack.c.b16 %v1341, %v1340
    %v1377 = vpack.c.b16 %v1343, %v1342
    %v1378 = vpack.c.b16 %v1345, %v1344
    %v1379 = vpack.c.b16 %v1347, %v1346
    %v1380 = vpack.c.b16 %v1349, %v1348
    %v1381 = vpack.c.b16 %v1351, %v1350
    %v1382 = vpack.c.b16 %v1353, %v1352
    %v1383 = vpack.c.b16 %v1355, %v1354
    %v1384 = vpack.c.b16 %v1357, %v1356
    %v1385 = vpack.c.b16 %v1359, %v1358
    %v1386 = vpack.c.b16 %v1361, %v1360
    %v1387 = vpack.c.b16 %v1363, %v1362
    %1412 = vmatprep.subr.bf16.mxu0 0
    %1413 = vmatpush1.bf16.msra.mxu0 %v1364
    %1414 = vmatprep.subr.bf16.mxu0 0
    %1415 = vmatpush1.bf16.msra.mxu0 %v1365
    %1416 = vmatprep.subr.bf16.mxu0 0
    %1417 = vmatpush1.bf16.msra.mxu0 %v1366
    %1418 = vmatprep.subr.bf16.mxu0 0
    %1419 = vmatpush1.bf16.msra.mxu0 %v1367
    %1420 = vmatprep.subr.bf16.mxu0 0
    %1421 = vmatpush1.bf16.msra.mxu0 %v1368
    %1422 = vmatprep.subr.bf16.mxu0 0
    %1423 = vmatpush1.bf16.msra.mxu0 %v1369
    %1424 = vmatprep.subr.bf16.mxu0 0
    %1425 = vmatpush1.bf16.msra.mxu0 %v1370
    %1426 = vmatprep.subr.bf16.mxu0 0
    %1427 = vmatpush1.bf16.msra.mxu0 %v1371
    %1428 = vmatprep.subr.bf16.mxu0 0
    %1429 = vmatpush1.bf16.msra.mxu0 %v1372
    %1430 = vmatprep.subr.bf16.mxu0 0
    %1431 = vmatpush1.bf16.msra.mxu0 %v1373
    %1432 = vmatprep.subr.bf16.mxu0 0
    %1433 = vmatpush1.bf16.msra.mxu0 %v1374
    %1434 = vmatprep.subr.bf16.mxu0 0
    %1435 = vmatpush1.bf16.msra.mxu0 %v1375
    %1436 = vmatprep.subr.bf16.mxu0 0
    %1437 = vmatpush1.bf16.msra.mxu0 %v1376
    %1438 = vmatprep.subr.bf16.mxu0 0
    %1439 = vmatpush1.bf16.msra.mxu0 %v1377
    %1440 = vmatprep.subr.bf16.mxu0 0
    %1441 = vmatpush1.bf16.msra.mxu0 %v1378
    %1442 = vmatprep.subr.bf16.mxu0 0
    %1443 = vmatpush1.bf16.msra.mxu0 %v1379
    %1444 = vmatprep.mubr.bf16.mxu0 %v1202
    %1445 = vmatmul.mubr.bf16.gmra.mrb[0].mxu0 %v1201
    %v1446 = vpop.f32.mrb[0].mxu0
    %v1447 = vadd.f32 %v1266, %v1446
    %v1448 = vpop.f32.mrb[0].mxu0
    %v1449 = vpop.f32.mrb[0].mxu0
    %v1450 = vadd.f32 %v1266, %v1449
    %v1451 = vpop.f32.mrb[0].mxu0
    %1452 = vmatprep.mubr.bf16.mxu0 %v1205
    %1453 = vmatmul.mubr.bf16.gmra.mrb[0].mxu0 %v1204
    %v1454 = vpop.f32.mrb[0].mxu0
    %v1455 = vadd.f32 %v1266, %v1454
    %v1456 = vpop.f32.mrb[0].mxu0
    %v1457 = vpop.f32.mrb[0].mxu0
    %v1458 = vadd.f32 %v1266, %v1457
    %v1459 = vpop.f32.mrb[0].mxu0
    %1460 = vmatprep.mubr.bf16.mxu0 %v1208
    %1461 = vmatmul.mubr.bf16.gmra.mrb[0].mxu0 %v1207
    %v1462 = vpop.f32.mrb[0].mxu0
    %v1463 = vadd.f32 %v1266, %v1462
    %v1464 = vpop.f32.mrb[0].mxu0
    %v1465 = vpop.f32.mrb[0].mxu0
    %v1466 = vadd.f32 %v1266, %v1465
    %v1467 = vpop.f32.mrb[0].mxu0
    %1468 = vmatprep.mubr.bf16.mxu0 %v1211
    %1469 = vmatmul.mubr.bf16.gmra.mrb[0].mxu0 %v1210
    %v1470 = vpop.f32.mrb[0].mxu0
    %v1471 = vadd.f32 %v1266, %v1470
    %v1472 = vpop.f32.mrb[0].mxu0
    %v1473 = vpop.f32.mrb[0].mxu0
    %v1474 = vadd.f32 %v1266, %v1473
    %v1475 = vpop.f32.mrb[0].mxu0
    %1476 = vdwg.mxu0
    %1477 = vmatprep.subr.bf16.mxu0 0
    %1478 = vmatpush1.bf16.msra.mxu0 %v1380
    %1479 = vmatprep.subr.bf16.mxu0 0
    %1480 = vmatpush1.bf16.msra.mxu0 %v1381
    %1481 = vmatprep.subr.bf16.mxu0 0
    %1482 = vmatpush1.bf16.msra.mxu0 %v1382
    %1483 = vmatprep.subr.bf16.mxu0 0
    %1484 = vmatpush1.bf16.msra.mxu0 %v1383
    %1485 = vmatprep.subr.bf16.mxu0 0
    %1486 = vmatpush1.bf16.msra.mxu0 %v1384
    %1487 = vmatprep.subr.bf16.mxu0 0
    %1488 = vmatpush1.bf16.msra.mxu0 %v1385
    %1489 = vmatprep.subr.bf16.mxu0 0
    %1490 = vmatpush1.bf16.msra.mxu0 %v1386
    %1491 = vmatprep.subr.bf16.mxu0 0
    %1492 = vmatpush1.bf16.msra.mxu0 %v1387
    %1493 = vmatprep.subr.bf16.mxu0 0
    %1494 = vmatpush1.bf16.msra.mxu0 0
    %1495 = vmatprep.subr.bf16.mxu0 0
    %1496 = vmatpush1.bf16.msra.mxu0 0
    %1497 = vmatprep.subr.bf16.mxu0 0
    %1498 = vmatpush1.bf16.msra.mxu0 0
    %1499 = vmatprep.subr.bf16.mxu0 0
    %1500 = vmatpush1.bf16.msra.mxu0 0
    %1501 = vmatprep.subr.bf16.mxu0 0
    %1502 = vmatpush1.bf16.msra.mxu0 0
    %1503 = vmatprep.subr.bf16.mxu0 0
    %1504 = vmatpush1.bf16.msra.mxu0 0
    %1505 = vmatprep.subr.bf16.mxu0 0
    %1506 = vmatpush1.bf16.msra.mxu0 0
    %1507 = vmatprep.subr.bf16.mxu0 0
    %1508 = vmatpush1.bf16.msra.mxu0 0
    %1509 = vmatprep.mubr.bf16.mxu0 0
    %1510 = vmatmul.mubr.bf16.gmra.mrb[0].mxu0 %v1203
    %v1511 = vpop.f32.mrb[0].mxu0
    %v1512 = vadd.f32 %v1447, %v1511
    %v1513 = vpop.f32.mrb[0].mxu0
    %v1514 = vpop.f32.mrb[0].mxu0
    %v1515 = vadd.f32 %v1450, %v1514
    %v1516 = vpop.f32.mrb[0].mxu0
    %1517 = vmatprep.mubr.bf16.mxu0 0
    %1518 = vmatmul.mubr.bf16.gmra.mrb[0].mxu0 %v1206
    %v1519 = vpop.f32.mrb[0].mxu0
    %v1520 = vadd.f32 %v1455, %v1519
    %v1521 = vpop.f32.mrb[0].mxu0
    %v1522 = vpop.f32.mrb[0].mxu0
    %v1523 = vadd.f32 %v1458, %v1522
    %v1524 = vpop.f32.mrb[0].mxu0
    %1525 = vmatprep.mubr.bf16.mxu0 0
    %1526 = vmatmul.mubr.bf16.gmra.mrb[0].mxu0 %v1209
    %v1527 = vpop.f32.mrb[0].mxu0
    %v1528 = vadd.f32 %v1463, %v1527
    %v1529 = vpop.f32.mrb[0].mxu0
    %v1530 = vpop.f32.mrb[0].mxu0
    %v1531 = vadd.f32 %v1466, %v1530
    %v1532 = vpop.f32.mrb[0].mxu0
    %1533 = vmatprep.mubr.bf16.mxu0 0
    %1534 = vmatmul.mubr.bf16.gmra.mrb[0].mxu0 %v1212
    %v1535 = vpop.f32.mrb[0].mxu0
    %v1536 = vadd.f32 %v1471, %v1535
    %v1537 = vpop.f32.mrb[0].mxu0
    %v1538 = vpop.f32.mrb[0].mxu0
    %v1539 = vadd.f32 %v1474, %v1538
    %v1540 = vpop.f32.mrb[0].mxu0
    %1541 = vdwg.mxu0
    %v1542 = vmul.f32 %v1512, 0.01
    %v1543 = vmul.f32 %v1515, 0.01
    %v1544 = vmul.f32 %v1520, 0.01
    %v1545 = vmul.f32 %v1523, 0.01
    %v1546 = vmul.f32 %v1528, 0.01
    %v1547 = vmul.f32 %v1531, 0.01
    %v1548 = vmul.f32 %v1536, 0.01
    %v1549 = vmul.f32 %v1539, 0.01
    %v1550 = vmax.f32 %v1512, %v1542
    %v1551 = vmax.f32 %v1515, %v1543
    %v1552 = vmax.f32 %v1520, %v1544
    %v1553 = vmax.f32 %v1523, %v1545
    %v1554 = vmax.f32 %v1528, %v1546
    %v1555 = vmax.f32 %v1531, %v1547
    %v1556 = vmax.f32 %v1536, %v1548
    %v1557 = vmax.f32 %v1539, %v1549
    %v1558 = vadd.f32 %v1550, %v102
    %v1559 = vadd.f32 %v1551, %v103
    %v1560 = vadd.f32 %v1552, %v104
    %v1561 = vadd.f32 %v1553, %v105
    %v1562 = vadd.f32 %v1554, %v106
    %v1563 = vadd.f32 %v1555, %v107
    %v1564 = vadd.f32 %v1556, %v108
    %v1565 = vadd.f32 %v1557, %v109
    %1566 = vst [vmem:[#allocation11] sm:$0xff] %v1558
    %1567 = vst [vmem:[#allocation11 + $0x8] sm:$0xff] %v1559
    %1568 = vst [vmem:[#allocation11 + $0x10] sm:$0xff] %v1560
    %1569 = vst [vmem:[#allocation11 + $0x18] sm:$0xff] %v1561
    %1570 = vst [vmem:[#allocation11 + $0x20] sm:$0xff] %v1562
    %1571 = vst [vmem:[#allocation11 + $0x28] sm:$0xff] %v1563
    %1572 = vst [vmem:[#allocation11 + $0x30] sm:$0xff] %v1564
    %1573 = vst [vmem:[#allocation11 + $0x38] sm:$0xff] %v1565
    // Predicated region
    $region58: #{tpu_custom_call.1} parent=1 // pred_check
      _
    $region59: #{tpu_custom_call.1} parent=1 // pred_check_branch
      %1575 = sbr.rel (0) target = $region61
    $region60: #{tpu_custom_call.1} parent=1 // pred_region
      %s1577 = ssub.s32 1024, 1024
      %1578 = vsyncadd [#allocation4], %s1577
      %s1579 = sshll.u32 [#allocation11], 4
      %s1580 = int_to_ptr.vmem [resolvable:$true] %s1579
      %1585 = dma.vmem_to_hbm [thread:$0]  %s1580, 1024, %s9, [#allocation4], 128, 128, 8
    $region61: #{tpu_custom_call.1} parent=1 // pred_fallthru
      _
    // Predicated region
    $region62: #{tpu_custom_call.1} parent=1 // pred_check
      _
    $region63: #{tpu_custom_call.1} parent=1 // pred_check_branch
      %1587 = sbr.rel (0) target = $region65
    $region64: #{tpu_custom_call.1} parent=1 // pred_region
      %1588 = dma.done [#allocation4], 1024
    $region65: #{tpu_custom_call.1} parent=1 // pred_fallthru
      _
    %1589 = vsyncpa [#allocation3], 1
    %1590 = vsyncpa [#allocation6], 1
    %1591 = vsyncpa [#allocation9], 1
    %1592 = vsyncpa [#allocation4], 1

</llo_original>
